<compile_context>
chip_gen: v7x
topology: tpu7x:2x2x1
jax: 0.10.0
libtpu: 0.0.40
codegen_flags: <defaults>
</compile_context>

<pallas_src>
import jax
import jax.numpy as jnp
from jax.experimental import pallas as pl
from jax.experimental.pallas import tpu as pltpu


def mlp_text_kernel(tw_ref, de_ref,
                    w_twe_ref, b_twe_ref, w_des_ref, b_des_ref,
                    w1t_ref, w1d_ref, b1_ref, w2_ref, b2_ref,
                    out_ref):
    """Fused: two branch Linears + ReLU, lin1 + ReLU, lin2 (eval dropout = no-op)."""
    # Branch GEMMs (f32 MXU accumulation), bias + ReLU on the VPU.
    t = jnp.dot(tw_ref[...], w_twe_ref[...], preferred_element_type=jnp.float32)
    t = jnp.maximum(t + b_twe_ref[...], 0.0)
    d = jnp.dot(de_ref[...], w_des_ref[...], preferred_element_type=jnp.float32)
    d = jnp.maximum(d + b_des_ref[...], 0.0)

    # lin1: concat([t, d], -1) @ w1  ==  t @ w1[:Hh] + d @ w1[Hh:]   (exact)
    wdt = w1t_ref.dtype
    f = (jnp.dot(t.astype(wdt), w1t_ref[...], preferred_element_type=jnp.float32)
         + jnp.dot(d.astype(wdt), w1d_ref[...], preferred_element_type=jnp.float32)
         + b1_ref[...])
    f = jnp.maximum(f, 0.0)

    # lin2 -> lane-dense 128-wide output block (columns >= 2 carry zero weight/bias).
    out_ref[...] = (jnp.dot(f.astype(w2_ref.dtype), w2_ref[...],
                            preferred_element_type=jnp.float32)
                    + b2_ref[...]).astype(out_ref.dtype)


def _round_up(x, m):
    return ((x + m - 1) // m) * m


def _pick_vmem_limit():
    """~75% of physical VMEM (~96 MiB on v5e/v6e, ~48 MiB on v7x)."""
    cap = 128 * 1024 * 1024
    try:
        cap = int(getattr(pltpu.get_tpu_info(), "vmem_capacity_bytes", cap))
    except Exception:
        pass
    return int(min(cap * 3 // 4, 100 * 1024 * 1024))


def pack_params(params, *, use_bf16=False):
    """One-time, layout-final packing of the parameters (do NOT call per forward).

    params = (w_twe, b_twe, w_des, b_des, w1, b1, w2, b2), weights stored
    [in_features, out_features] (transposed vs PyTorch nn.Linear.weight).
    """
    (w_twe, b_twe, w_des, b_des, w1, b1, w2, b2) = params
    H = w1.shape[0]
    Hh = w_twe.shape[1]
    assert H == 2 * Hh, "hidden_size must be even"
    wdt = jnp.bfloat16 if use_bf16 else jnp.float32

    # Lane-dense final layer: pad the 2 output columns up to 128.
    w2p = jnp.zeros((H, 128), jnp.float32).at[:, :2].set(w2.astype(jnp.float32))
    b2p = jnp.zeros((1, 128), jnp.float32).at[:, :2].set(
        b2.reshape(1, 2).astype(jnp.float32))

    return {
        "w_twe": w_twe.astype(wdt),
        "b_twe": b_twe.reshape(1, Hh).astype(jnp.float32),
        "w_des": w_des.astype(wdt),
        "b_des": b_des.reshape(1, Hh).astype(jnp.float32),
        "w1t": w1[:Hh].astype(wdt),   # multiplies the tweet branch
        "w1d": w1[Hh:].astype(wdt),   # multiplies the des branch
        "b1": b1.reshape(1, H).astype(jnp.float32),
        "w2": w2p.astype(wdt),
        "b2": b2p,                    # biases stay f32 (added after f32 accumulation)
    }


def mlp_text_forward(tweet, des, packed, *, tile_b=512):
    """Fused MLP_text forward. tweet: [B, tweet_dim], des: [B, des_dim]."""
    B, Td = tweet.shape
    Dd = des.shape[1]
    Hh = packed["w_twe"].shape[1]
    H = 2 * Hh
    wdt = packed["w_twe"].dtype

    # Stream activations in the weights' dtype (bf16 halves HBM traffic and
    # feeds the bf16 MXU; f32 keeps the exact-reference path). No-op if equal.
    tweet = tweet.astype(wdt)
    des = des.astype(wdt)

    # Batch tile: multiple of the sublane packing (16 for bf16, 8 for f32) or
    # the full extent. For small batches aim for >=2 grid steps so v7x's two
    # TensorCores both get work; the partial last block is masked by Pallas.
    align = 16 if wdt == jnp.bfloat16 else 8
    if B <= align:
        tile = B                                   # single full-extent block
    else:
        half = (B + 1) // 2
        tile = _round_up(min(int(tile_b), half), align)
    n_tiles = pl.cdiv(B, tile)

    def resident(shape, single_buffer):
        # Weights / biases: constant block index -> stay VMEM-resident.
        idx = lambda *_: (0,) * len(shape)
        if single_buffer:
            return pl.BlockSpec(shape, idx, pipeline_mode=pl.Buffered(1))
        return pl.BlockSpec(shape, idx)

    def run(single_buffer):
        grid_spec = pltpu.PrefetchScalarGridSpec(
            num_scalar_prefetch=0,
            grid=(n_tiles,),
            in_specs=[
                pl.BlockSpec((tile, Td), lambda i: (i, 0)),   # streamed tweet rows
                pl.BlockSpec((tile, Dd), lambda i: (i, 0)),   # streamed des rows
                resident((Td, Hh), single_buffer),
                resident((1, Hh), single_buffer),
                resident((Dd, Hh), single_buffer),
                resident((1, Hh), single_buffer),
                resident((Hh, H), single_buffer),
                resident((Hh, H), single_buffer),
                resident((1, H), single_buffer),
                resident((H, 128), single_buffer),
                resident((1, 128), single_buffer),
            ],
            out_specs=pl.BlockSpec((tile, 128), lambda i: (i, 0)),
        )
        return pl.pallas_call(
            mlp_text_kernel,
            out_shape=jax.ShapeDtypeStruct((B, 128), jnp.float32),
            grid_spec=grid_spec,
            compiler_params=pltpu.CompilerParams(
                dimension_semantics=("parallel",),   # shards over v7x's 2 TCs
                vmem_limit_bytes=_pick_vmem_limit(),
            ),
        )(tweet, des,
          packed["w_twe"], packed["b_twe"], packed["w_des"], packed["b_des"],
          packed["w1t"], packed["w1d"], packed["b1"],
          packed["w2"], packed["b2"])

    try:
        # Constant-index blocks don't need double buffers -> halves resident VMEM.
        out = run(single_buffer=True)
    except Exception:
        # Fallback for jax versions without pipeline_mode=pl.Buffered support.
        out = run(single_buffer=False)

    return out[:, :2]


def init_params(key, tweet_dim, des_dim, hidden_size):
    """Deterministic PyTorch-Linear-style init (uniform +-1/sqrt(fan_in))."""
    Hh = hidden_size // 2
    keys = jax.random.split(key, 8)

    def lin(kw, kb, fan_in, fan_out):
        bound = 1.0 / jnp.sqrt(fan_in)
        w = jax.random.uniform(kw, (fan_in, fan_out), jnp.float32, -bound, bound)
        b = jax.random.uniform(kb, (fan_out,), jnp.float32, -bound, bound)
        return w, b

    w_twe, b_twe = lin(keys[0], keys[1], tweet_dim, Hh)
    w_des, b_des = lin(keys[2], keys[3], des_dim, Hh)
    w1, b1 = lin(keys[4], keys[5], hidden_size, hidden_size)
    w2, b2 = lin(keys[6], keys[7], hidden_size, 2)
    return (w_twe, b_twe, w_des, b_des, w1, b1, w2, b2)


def reference_forward(tweet, des, params):
    (w_twe, b_twe, w_des, b_des, w1, b1, w2, b2) = params
    t = jnp.maximum(tweet @ w_twe + b_twe, 0.0)
    d = jnp.maximum(des @ w_des + b_des, 0.0)
    f = jnp.concatenate([t, d], axis=-1)
    f = jnp.maximum(f @ w1 + b1, 0.0)
    return f @ w2 + b2


if __name__ == "__main__":
    B, TWEET_DIM, DES_DIM, HIDDEN = 8, 16, 24, 256   # Hh = 128 -> lane-aligned split

    key = jax.random.PRNGKey(0)
    k_tw, k_de, k_p = jax.random.split(key, 3)
    tweet = jax.random.normal(k_tw, (B, TWEET_DIM), jnp.float32)
    des = jax.random.normal(k_de, (B, DES_DIM), jnp.float32)
    params = init_params(k_p, TWEET_DIM, DES_DIM, HIDDEN)
    packed = pack_params(params)                      # one-time packing

    out = jax.block_until_ready(mlp_text_forward(tweet, des, packed))
    ref = reference_forward(tweet, des, params)
    assert out.shape == (B, 2)
    assert jnp.allclose(out, ref, atol=1e-4, rtol=1e-4), "mismatch vs reference"

    # Multi-tile path: partial last block handled by Pallas (no wrapper padding).
    B2 = 1030
    k_tw2, k_de2 = jax.random.split(jax.random.PRNGKey(1))
    tweet2 = jax.random.normal(k_tw2, (B2, TWEET_DIM), jnp.float32)
    des2 = jax.random.normal(k_de2, (B2, DES_DIM), jnp.float32)
    out2 = jax.block_until_ready(mlp_text_forward(tweet2, des2, packed, tile_b=512))
    ref2 = reference_forward(tweet2, des2, params)
    assert out2.shape == (B2, 2)
    assert jnp.allclose(out2, ref2, atol=1e-4, rtol=1e-4), "mismatch (tiled path)"

    # Optional bf16 streaming/weights path (f32 accumulation): looser tolerance.
    packed_bf16 = pack_params(params, use_bf16=True)
    B3 = 64
    k_tw3, k_de3 = jax.random.split(jax.random.PRNGKey(2))
    tweet3 = jax.random.normal(k_tw3, (B3, TWEET_DIM), jnp.float32)
    des3 = jax.random.normal(k_de3, (B3, DES_DIM), jnp.float32)
    out3 = jax.block_until_ready(mlp_text_forward(tweet3, des3, packed_bf16))
    ref3 = reference_forward(tweet3, des3, params)
    assert out3.shape == (B3, 2)
    assert jnp.allclose(out3, ref3, atol=1e-1, rtol=1e-1), "mismatch (bf16 path)"

    print("KERNEL_OK")
</pallas_src>

<mosaic_0001>
module attributes {stable_mosaic.version = 11 : i64} {
  func.func @mlp_text_kernel(%arg0: i32, %arg1: memref<8x16xf32, #tpu.memory_space<vmem>>, %arg2: memref<8x24xf32, #tpu.memory_space<vmem>>, %arg3: memref<16x128xf32, #tpu.memory_space<vmem>>, %arg4: memref<1x128xf32, #tpu.memory_space<vmem>>, %arg5: memref<24x128xf32, #tpu.memory_space<vmem>>, %arg6: memref<1x128xf32, #tpu.memory_space<vmem>>, %arg7: memref<128x256xf32, #tpu.memory_space<vmem>>, %arg8: memref<128x256xf32, #tpu.memory_space<vmem>>, %arg9: memref<1x256xf32, #tpu.memory_space<vmem>>, %arg10: memref<256x128xf32, #tpu.memory_space<vmem>>, %arg11: memref<1x128xf32, #tpu.memory_space<vmem>>, %arg12: memref<8x128xf32, #tpu.memory_space<vmem>>) attributes {dimension_semantics = [#tpu.dimension_semantics<parallel>], iteration_bounds = array<i64: 1>, scalar_prefetch = 0 : i64, scratch_operands = 0 : i64, tpu.core_type = #tpu.core_type<tc>, window_params = [{transform_indices = @transform_0, window_bounds = array<i64: 8, 16>}, {transform_indices = @transform_1, window_bounds = array<i64: 8, 24>}, {pipeline_mode = #tpu.pipeline_mode<synchronous>, transform_indices = @transform_2, window_bounds = array<i64: 16, 128>}, {pipeline_mode = #tpu.pipeline_mode<synchronous>, transform_indices = @transform_3, window_bounds = array<i64: 1, 128>}, {pipeline_mode = #tpu.pipeline_mode<synchronous>, transform_indices = @transform_4, window_bounds = array<i64: 24, 128>}, {pipeline_mode = #tpu.pipeline_mode<synchronous>, transform_indices = @transform_5, window_bounds = array<i64: 1, 128>}, {pipeline_mode = #tpu.pipeline_mode<synchronous>, transform_indices = @transform_6, window_bounds = array<i64: 128, 256>}, {pipeline_mode = #tpu.pipeline_mode<synchronous>, transform_indices = @transform_7, window_bounds = array<i64: 128, 256>}, {pipeline_mode = #tpu.pipeline_mode<synchronous>, transform_indices = @transform_8, window_bounds = array<i64: 1, 256>}, {pipeline_mode = #tpu.pipeline_mode<synchronous>, transform_indices = @transform_9, window_bounds = array<i64: 256, 128>}, {pipeline_mode = #tpu.pipeline_mode<synchronous>, transform_indices = @transform_10, window_bounds = array<i64: 1, 128>}, {transform_indices = @transform_11, window_bounds = array<i64: 8, 128>}]} {
    %c0 = arith.constant 0 : index
    %c0_0 = arith.constant 0 : index
    %0 = vector.load %arg1[%c0, %c0_0] : memref<8x16xf32, #tpu.memory_space<vmem>>, vector<8x16xf32>
    %c0_1 = arith.constant 0 : index
    %c0_2 = arith.constant 0 : index
    %1 = vector.load %arg3[%c0_1, %c0_2] : memref<16x128xf32, #tpu.memory_space<vmem>>, vector<16x128xf32>
    %cst = arith.constant dense<0.000000e+00> : vector<8x128xf32>
    %2 = tpu.matmul %0, %1, %cst {dimension_numbers = #tpu.dot_dimension_numbers<[1], [0], [0], [1], [0, 0, 1, 1], [], []>} : vector<8x16xf32>, vector<16x128xf32>, vector<8x128xf32> -> vector<8x128xf32>
    %c0_3 = arith.constant 0 : index
    %c0_4 = arith.constant 0 : index
    %3 = vector.load %arg4[%c0_3, %c0_4] : memref<1x128xf32, #tpu.memory_space<vmem>>, vector<1x128xf32>
    %4 = vector.broadcast %3 : vector<1x128xf32> to vector<8x128xf32>
    %5 = arith.addf %2, %4 : vector<8x128xf32>
    %cst_5 = arith.constant 0.000000e+00 : f32
    %6 = vector.broadcast %cst_5 : f32 to vector<8x128xf32>
    %7 = arith.maximumf %5, %6 : vector<8x128xf32>
    %c0_6 = arith.constant 0 : index
    %c0_7 = arith.constant 0 : index
    %8 = vector.load %arg2[%c0_6, %c0_7] : memref<8x24xf32, #tpu.memory_space<vmem>>, vector<8x24xf32>
    %c0_8 = arith.constant 0 : index
    %c0_9 = arith.constant 0 : index
    %9 = vector.load %arg5[%c0_8, %c0_9] : memref<24x128xf32, #tpu.memory_space<vmem>>, vector<24x128xf32>
    %cst_10 = arith.constant dense<0.000000e+00> : vector<8x128xf32>
    %10 = tpu.matmul %8, %9, %cst_10 {dimension_numbers = #tpu.dot_dimension_numbers<[1], [0], [0], [1], [0, 0, 1, 1], [], []>} : vector<8x24xf32>, vector<24x128xf32>, vector<8x128xf32> -> vector<8x128xf32>
    %c0_11 = arith.constant 0 : index
    %c0_12 = arith.constant 0 : index
    %11 = vector.load %arg6[%c0_11, %c0_12] : memref<1x128xf32, #tpu.memory_space<vmem>>, vector<1x128xf32>
    %12 = vector.broadcast %11 : vector<1x128xf32> to vector<8x128xf32>
    %13 = arith.addf %10, %12 : vector<8x128xf32>
    %cst_13 = arith.constant 0.000000e+00 : f32
    %14 = vector.broadcast %cst_13 : f32 to vector<8x128xf32>
    %15 = arith.maximumf %13, %14 : vector<8x128xf32>
    %c0_14 = arith.constant 0 : index
    %c0_15 = arith.constant 0 : index
    %16 = vector.load %arg7[%c0_14, %c0_15] : memref<128x256xf32, #tpu.memory_space<vmem>>, vector<128x256xf32>
    %cst_16 = arith.constant dense<0.000000e+00> : vector<8x256xf32>
    %17 = tpu.matmul %7, %16, %cst_16 {dimension_numbers = #tpu.dot_dimension_numbers<[1], [0], [0], [1], [0, 0, 1, 1], [], []>} : vector<8x128xf32>, vector<128x256xf32>, vector<8x256xf32> -> vector<8x256xf32>
    %c0_17 = arith.constant 0 : index
    %c0_18 = arith.constant 0 : index
    %18 = vector.load %arg8[%c0_17, %c0_18] : memref<128x256xf32, #tpu.memory_space<vmem>>, vector<128x256xf32>
    %cst_19 = arith.constant dense<0.000000e+00> : vector<8x256xf32>
    %19 = tpu.matmul %15, %18, %cst_19 {dimension_numbers = #tpu.dot_dimension_numbers<[1], [0], [0], [1], [0, 0, 1, 1], [], []>} : vector<8x128xf32>, vector<128x256xf32>, vector<8x256xf32> -> vector<8x256xf32>
    %20 = arith.addf %17, %19 : vector<8x256xf32>
    %c0_20 = arith.constant 0 : index
    %c0_21 = arith.constant 0 : index
    %21 = vector.load %arg9[%c0_20, %c0_21] : memref<1x256xf32, #tpu.memory_space<vmem>>, vector<1x256xf32>
    %22 = vector.broadcast %21 : vector<1x256xf32> to vector<8x256xf32>
    %23 = arith.addf %20, %22 : vector<8x256xf32>
    %cst_22 = arith.constant 0.000000e+00 : f32
    %24 = vector.broadcast %cst_22 : f32 to vector<8x256xf32>
    %25 = arith.maximumf %23, %24 : vector<8x256xf32>
    %c0_23 = arith.constant 0 : index
    %c0_24 = arith.constant 0 : index
    %26 = vector.load %arg10[%c0_23, %c0_24] : memref<256x128xf32, #tpu.memory_space<vmem>>, vector<256x128xf32>
    %cst_25 = arith.constant dense<0.000000e+00> : vector<8x128xf32>
    %27 = tpu.matmul %25, %26, %cst_25 {dimension_numbers = #tpu.dot_dimension_numbers<[1], [0], [0], [1], [0, 0, 1, 1], [], []>} : vector<8x256xf32>, vector<256x128xf32>, vector<8x128xf32> -> vector<8x128xf32>
    %c0_26 = arith.constant 0 : index
    %c0_27 = arith.constant 0 : index
    %28 = vector.load %arg11[%c0_26, %c0_27] : memref<1x128xf32, #tpu.memory_space<vmem>>, vector<1x128xf32>
    %29 = vector.broadcast %28 : vector<1x128xf32> to vector<8x128xf32>
    %30 = arith.addf %27, %29 : vector<8x128xf32>
    %c0_28 = arith.constant 0 : index
    %c0_29 = arith.constant 0 : index
    %31 = vector.load %arg12[%c0_28, %c0_29] : memref<8x128xf32, #tpu.memory_space<vmem>>, vector<8x128xf32>
    tpu.vector_store %arg12[%c0_28, %c0_29], %30 {strides = array<i32>} : memref<8x128xf32, #tpu.memory_space<vmem>>, vector<8x128xf32>,
    return
  }
  func.func @transform_0(%arg0: i32) -> (i32, i32) {
    %c0_i32 = arith.constant 0 : i32
    %c0_i32_0 = arith.constant 0 : i32
    return %arg0, %c0_i32 : i32, i32
  }
  func.func @transform_1(%arg0: i32) -> (i32, i32) {
    %c0_i32 = arith.constant 0 : i32
    %c0_i32_0 = arith.constant 0 : i32
    return %arg0, %c0_i32 : i32, i32
  }
  func.func @transform_2(%arg0: i32) -> (i32, i32) {
    %c0_i32 = arith.constant 0 : i32
    %c0_i32_0 = arith.constant 0 : i32
    %c0_i32_1 = arith.constant 0 : i32
    return %c0_i32, %c0_i32_0 : i32, i32
  }
  func.func @transform_3(%arg0: i32) -> (i32, i32) {
    %c0_i32 = arith.constant 0 : i32
    %c0_i32_0 = arith.constant 0 : i32
    %c0_i32_1 = arith.constant 0 : i32
    return %c0_i32, %c0_i32_0 : i32, i32
  }
  func.func @transform_4(%arg0: i32) -> (i32, i32) {
    %c0_i32 = arith.constant 0 : i32
    %c0_i32_0 = arith.constant 0 : i32
    %c0_i32_1 = arith.constant 0 : i32
    return %c0_i32, %c0_i32_0 : i32, i32
  }
  func.func @transform_5(%arg0: i32) -> (i32, i32) {
    %c0_i32 = arith.constant 0 : i32
    %c0_i32_0 = arith.constant 0 : i32
    %c0_i32_1 = arith.constant 0 : i32
    return %c0_i32, %c0_i32_0 : i32, i32
  }
  func.func @transform_6(%arg0: i32) -> (i32, i32) {
    %c0_i32 = arith.constant 0 : i32
    %c0_i32_0 = arith.constant 0 : i32
    %c0_i32_1 = arith.constant 0 : i32
    return %c0_i32, %c0_i32_0 : i32, i32
  }
  func.func @transform_7(%arg0: i32) -> (i32, i32) {
    %c0_i32 = arith.constant 0 : i32
    %c0_i32_0 = arith.constant 0 : i32
    %c0_i32_1 = arith.constant 0 : i32
    return %c0_i32, %c0_i32_0 : i32, i32
  }
  func.func @transform_8(%arg0: i32) -> (i32, i32) {
    %c0_i32 = arith.constant 0 : i32
    %c0_i32_0 = arith.constant 0 : i32
    %c0_i32_1 = arith.constant 0 : i32
    return %c0_i32, %c0_i32_0 : i32, i32
  }
  func.func @transform_9(%arg0: i32) -> (i32, i32) {
    %c0_i32 = arith.constant 0 : i32
    %c0_i32_0 = arith.constant 0 : i32
    %c0_i32_1 = arith.constant 0 : i32
    return %c0_i32, %c0_i32_0 : i32, i32
  }
  func.func @transform_10(%arg0: i32) -> (i32, i32) {
    %c0_i32 = arith.constant 0 : i32
    %c0_i32_0 = arith.constant 0 : i32
    %c0_i32_1 = arith.constant 0 : i32
    return %c0_i32, %c0_i32_0 : i32, i32
  }
  func.func @transform_11(%arg0: i32) -> (i32, i32) {
    %c0_i32 = arith.constant 0 : i32
    %c0_i32_0 = arith.constant 0 : i32
    return %arg0, %c0_i32 : i32, i32
  }
}

module attributes {stable_mosaic.version = 11 : i64} {
  func.func @mlp_text_kernel(%arg0: i32, %arg1: memref<8x16xf32, #tpu.memory_space<vmem>>, %arg2: memref<8x24xf32, #tpu.memory_space<vmem>>, %arg3: memref<16x128xf32, #tpu.memory_space<vmem>>, %arg4: memref<1x128xf32, #tpu.memory_space<vmem>>, %arg5: memref<24x128xf32, #tpu.memory_space<vmem>>, %arg6: memref<1x128xf32, #tpu.memory_space<vmem>>, %arg7: memref<128x256xf32, #tpu.memory_space<vmem>>, %arg8: memref<128x256xf32, #tpu.memory_space<vmem>>, %arg9: memref<1x256xf32, #tpu.memory_space<vmem>>, %arg10: memref<256x128xf32, #tpu.memory_space<vmem>>, %arg11: memref<1x128xf32, #tpu.memory_space<vmem>>, %arg12: memref<8x128xf32, #tpu.memory_space<vmem>>) attributes {dimension_semantics = [#tpu.dimension_semantics<parallel>], iteration_bounds = array<i64: 1>, scalar_prefetch = 0 : i64, scratch_operands = 0 : i64, tpu.core_type = #tpu.core_type<tc>, window_params = [{transform_indices = @transform_0, window_bounds = array<i64: 8, 16>}, {transform_indices = @transform_1, window_bounds = array<i64: 8, 24>}, {pipeline_mode = #tpu.pipeline_mode<synchronous>, transform_indices = @transform_2, window_bounds = array<i64: 16, 128>}, {pipeline_mode = #tpu.pipeline_mode<synchronous>, transform_indices = @transform_3, window_bounds = array<i64: 1, 128>}, {pipeline_mode = #tpu.pipeline_mode<synchronous>, transform_indices = @transform_4, window_bounds = array<i64: 24, 128>}, {pipeline_mode = #tpu.pipeline_mode<synchronous>, transform_indices = @transform_5, window_bounds = array<i64: 1, 128>}, {pipeline_mode = #tpu.pipeline_mode<synchronous>, transform_indices = @transform_6, window_bounds = array<i64: 128, 256>}, {pipeline_mode = #tpu.pipeline_mode<synchronous>, transform_indices = @transform_7, window_bounds = array<i64: 128, 256>}, {pipeline_mode = #tpu.pipeline_mode<synchronous>, transform_indices = @transform_8, window_bounds = array<i64: 1, 256>}, {pipeline_mode = #tpu.pipeline_mode<synchronous>, transform_indices = @transform_9, window_bounds = array<i64: 256, 128>}, {pipeline_mode = #tpu.pipeline_mode<synchronous>, transform_indices = @transform_10, window_bounds = array<i64: 1, 128>}, {transform_indices = @transform_11, window_bounds = array<i64: 8, 128>}]} {
    %c0 = arith.constant 0 : index
    %c0_0 = arith.constant 0 : index
    %0 = vector.load %arg1[%c0, %c0_0] : memref<8x16xf32, #tpu.memory_space<vmem>>, vector<8x16xf32>
    %c0_1 = arith.constant 0 : index
    %c0_2 = arith.constant 0 : index
    %1 = vector.load %arg3[%c0_1, %c0_2] : memref<16x128xf32, #tpu.memory_space<vmem>>, vector<16x128xf32>
    %cst = arith.constant dense<0.000000e+00> : vector<8x128xf32>
    %2 = tpu.matmul %0, %1, %cst {dimension_numbers = #tpu.dot_dimension_numbers<[1], [0], [0], [1], [0, 0, 1, 1], [], []>} : vector<8x16xf32>, vector<16x128xf32>, vector<8x128xf32> -> vector<8x128xf32>
    %c0_3 = arith.constant 0 : index
    %c0_4 = arith.constant 0 : index
    %3 = vector.load %arg4[%c0_3, %c0_4] : memref<1x128xf32, #tpu.memory_space<vmem>>, vector<1x128xf32>
    %4 = vector.broadcast %3 : vector<1x128xf32> to vector<8x128xf32>
    %5 = arith.addf %2, %4 : vector<8x128xf32>
    %cst_5 = arith.constant 0.000000e+00 : f32
    %6 = vector.broadcast %cst_5 : f32 to vector<8x128xf32>
    %7 = arith.maximumf %5, %6 : vector<8x128xf32>
    %c0_6 = arith.constant 0 : index
    %c0_7 = arith.constant 0 : index
    %8 = vector.load %arg2[%c0_6, %c0_7] : memref<8x24xf32, #tpu.memory_space<vmem>>, vector<8x24xf32>
    %c0_8 = arith.constant 0 : index
    %c0_9 = arith.constant 0 : index
    %9 = vector.load %arg5[%c0_8, %c0_9] : memref<24x128xf32, #tpu.memory_space<vmem>>, vector<24x128xf32>
    %cst_10 = arith.constant dense<0.000000e+00> : vector<8x128xf32>
    %10 = tpu.matmul %8, %9, %cst_10 {dimension_numbers = #tpu.dot_dimension_numbers<[1], [0], [0], [1], [0, 0, 1, 1], [], []>} : vector<8x24xf32>, vector<24x128xf32>, vector<8x128xf32> -> vector<8x128xf32>
    %c0_11 = arith.constant 0 : index
    %c0_12 = arith.constant 0 : index
    %11 = vector.load %arg6[%c0_11, %c0_12] : memref<1x128xf32, #tpu.memory_space<vmem>>, vector<1x128xf32>
    %12 = vector.broadcast %11 : vector<1x128xf32> to vector<8x128xf32>
    %13 = arith.addf %10, %12 : vector<8x128xf32>
    %cst_13 = arith.constant 0.000000e+00 : f32
    %14 = vector.broadcast %cst_13 : f32 to vector<8x128xf32>
    %15 = arith.maximumf %13, %14 : vector<8x128xf32>
    %c0_14 = arith.constant 0 : index
    %c0_15 = arith.constant 0 : index
    %16 = vector.load %arg7[%c0_14, %c0_15] : memref<128x256xf32, #tpu.memory_space<vmem>>, vector<128x256xf32>
    %cst_16 = arith.constant dense<0.000000e+00> : vector<8x256xf32>
    %17 = tpu.matmul %7, %16, %cst_16 {dimension_numbers = #tpu.dot_dimension_numbers<[1], [0], [0], [1], [0, 0, 1, 1], [], []>} : vector<8x128xf32>, vector<128x256xf32>, vector<8x256xf32> -> vector<8x256xf32>
    %c0_17 = arith.constant 0 : index
    %c0_18 = arith.constant 0 : index
    %18 = vector.load %arg8[%c0_17, %c0_18] : memref<128x256xf32, #tpu.memory_space<vmem>>, vector<128x256xf32>
    %cst_19 = arith.constant dense<0.000000e+00> : vector<8x256xf32>
    %19 = tpu.matmul %15, %18, %cst_19 {dimension_numbers = #tpu.dot_dimension_numbers<[1], [0], [0], [1], [0, 0, 1, 1], [], []>} : vector<8x128xf32>, vector<128x256xf32>, vector<8x256xf32> -> vector<8x256xf32>
    %20 = arith.addf %17, %19 : vector<8x256xf32>
    %c0_20 = arith.constant 0 : index
    %c0_21 = arith.constant 0 : index
    %21 = vector.load %arg9[%c0_20, %c0_21] : memref<1x256xf32, #tpu.memory_space<vmem>>, vector<1x256xf32>
    %22 = vector.broadcast %21 : vector<1x256xf32> to vector<8x256xf32>
    %23 = arith.addf %20, %22 : vector<8x256xf32>
    %cst_22 = arith.constant 0.000000e+00 : f32
    %24 = vector.broadcast %cst_22 : f32 to vector<8x256xf32>
    %25 = arith.maximumf %23, %24 : vector<8x256xf32>
    %c0_23 = arith.constant 0 : index
    %c0_24 = arith.constant 0 : index
    %26 = vector.load %arg10[%c0_23, %c0_24] : memref<256x128xf32, #tpu.memory_space<vmem>>, vector<256x128xf32>
    %cst_25 = arith.constant dense<0.000000e+00> : vector<8x128xf32>
    %27 = tpu.matmul %25, %26, %cst_25 {dimension_numbers = #tpu.dot_dimension_numbers<[1], [0], [0], [1], [0, 0, 1, 1], [], []>} : vector<8x256xf32>, vector<256x128xf32>, vector<8x128xf32> -> vector<8x128xf32>
    %c0_26 = arith.constant 0 : index
    %c0_27 = arith.constant 0 : index
    %28 = vector.load %arg11[%c0_26, %c0_27] : memref<1x128xf32, #tpu.memory_space<vmem>>, vector<1x128xf32>
    %29 = vector.broadcast %28 : vector<1x128xf32> to vector<8x128xf32>
    %30 = arith.addf %27, %29 : vector<8x128xf32>
    %c0_28 = arith.constant 0 : index
    %c0_29 = arith.constant 0 : index
    %31 = vector.load %arg12[%c0_28, %c0_29] : memref<8x128xf32, #tpu.memory_space<vmem>>, vector<8x128xf32>
    tpu.vector_store %arg12[%c0_28, %c0_29], %30 {strides = array<i32>} : memref<8x128xf32, #tpu.memory_space<vmem>>, vector<8x128xf32>,
    return
  }
  func.func @transform_0(%arg0: i32) -> (i32, i32) {
    %c0_i32 = arith.constant 0 : i32
    %c0_i32_0 = arith.constant 0 : i32
    return %arg0, %c0_i32 : i32, i32
  }
  func.func @transform_1(%arg0: i32) -> (i32, i32) {
    %c0_i32 = arith.constant 0 : i32
    %c0_i32_0 = arith.constant 0 : i32
    return %arg0, %c0_i32 : i32, i32
  }
  func.func @transform_2(%arg0: i32) -> (i32, i32) {
    %c0_i32 = arith.constant 0 : i32
    %c0_i32_0 = arith.constant 0 : i32
    %c0_i32_1 = arith.constant 0 : i32
    return %c0_i32, %c0_i32_0 : i32, i32
  }
  func.func @transform_3(%arg0: i32) -> (i32, i32) {
    %c0_i32 = arith.constant 0 : i32
    %c0_i32_0 = arith.constant 0 : i32
    %c0_i32_1 = arith.constant 0 : i32
    return %c0_i32, %c0_i32_0 : i32, i32
  }
  func.func @transform_4(%arg0: i32) -> (i32, i32) {
    %c0_i32 = arith.constant 0 : i32
    %c0_i32_0 = arith.constant 0 : i32
    %c0_i32_1 = arith.constant 0 : i32
    return %c0_i32, %c0_i32_0 : i32, i32
  }
  func.func @transform_5(%arg0: i32) -> (i32, i32) {
    %c0_i32 = arith.constant 0 : i32
    %c0_i32_0 = arith.constant 0 : i32
    %c0_i32_1 = arith.constant 0 : i32
    return %c0_i32, %c0_i32_0 : i32, i32
  }
  func.func @transform_6(%arg0: i32) -> (i32, i32) {
    %c0_i32 = arith.constant 0 : i32
    %c0_i32_0 = arith.constant 0 : i32
    %c0_i32_1 = arith.constant 0 : i32
    return %c0_i32, %c0_i32_0 : i32, i32
  }
  func.func @transform_7(%arg0: i32) -> (i32, i32) {
    %c0_i32 = arith.constant 0 : i32
    %c0_i32_0 = arith.constant 0 : i32
    %c0_i32_1 = arith.constant 0 : i32
    return %c0_i32, %c0_i32_0 : i32, i32
  }
  func.func @transform_8(%arg0: i32) -> (i32, i32) {
    %c0_i32 = arith.constant 0 : i32
    %c0_i32_0 = arith.constant 0 : i32
    %c0_i32_1 = arith.constant 0 : i32
    return %c0_i32, %c0_i32_0 : i32, i32
  }
  func.func @transform_9(%arg0: i32) -> (i32, i32) {
    %c0_i32 = arith.constant 0 : i32
    %c0_i32_0 = arith.constant 0 : i32
    %c0_i32_1 = arith.constant 0 : i32
    return %c0_i32, %c0_i32_0 : i32, i32
  }
  func.func @transform_10(%arg0: i32) -> (i32, i32) {
    %c0_i32 = arith.constant 0 : i32
    %c0_i32_0 = arith.constant 0 : i32
    %c0_i32_1 = arith.constant 0 : i32
    return %c0_i32, %c0_i32_0 : i32, i32
  }
  func.func @transform_11(%arg0: i32) -> (i32, i32) {
    %c0_i32 = arith.constant 0 : i32
    %c0_i32_0 = arith.constant 0 : i32
    return %arg0, %c0_i32 : i32, i32
  }
}

</mosaic_0001>

<llo_original>
// kernel: tpu_custom_call.1
$region0: #{tpu_custom_call.1}
  #allocation0 [shape = 'u32[]', space=smem, size = 0x4, offset = 0x4, fixed_abs, tag = 'smem constant byte address 0x4 - core index']
  #allocation1 [shape = 'u32[144,128]{1,0:T(1,128)}', space=vmem, size = 0x12000, scoped, tag = 'internal scratch']
  %s0 = inlined_call_operand.hbm [shape: f32[8,16], index: 0, kind: input, shape index: {}]
  %s1 = inlined_call_operand.hbm [shape: f32[8,24], index: 1, kind: input, shape index: {}]
  %s2 = inlined_call_operand.hbm [shape: f32[16,128], index: 2, kind: input, shape index: {}]
  %s3 = inlined_call_operand.hbm [shape: f32[1,128], index: 3, kind: input, shape index: {}]
  %s4 = inlined_call_operand.hbm [shape: f32[24,128], index: 4, kind: input, shape index: {}]
  %s5 = inlined_call_operand.hbm [shape: f32[1,128], index: 5, kind: input, shape index: {}]
  %s6 = inlined_call_operand.hbm [shape: f32[128,256], index: 6, kind: input, shape index: {}]
  %s7 = inlined_call_operand.hbm [shape: f32[128,256], index: 7, kind: input, shape index: {}]
  %s8 = inlined_call_operand.hbm [shape: f32[1,256], index: 8, kind: input, shape index: {}]
  %s9 = inlined_call_operand.hbm [shape: f32[256,128], index: 9, kind: input, shape index: {}]
  %s10 = inlined_call_operand.hbm [shape: f32[1,128], index: 10, kind: input, shape index: {}]
  %s11 = inlined_call_operand.hbm [shape: f32[8,128], index: 11, kind: output, shape index: {}]
  %s12 = sld [smem:[#allocation0]]
  $region98: #{tpu_custom_call.1} parent=0
    _
  %s14 = ssub.s32 1, %s12
  %s15 = scalar_select 0, %s14, %s12
  $region1: #{tpu_custom_call.1} parent=0
    #allocation2 [shape = 'u8[4096]{0}', space=vmem, size = 0x1000, scoped, tag = 'input window, operand 0, single buffered']
    #allocation3 [shape = 's32[1]{0}', space=sflag, size = 0x4, scoped, tag = 'scoped memory for tpu_custom_call.1']
    #allocation4 [shape = 's32[1]{0}', space=sflag, size = 0x4, scoped, tag = 'scoped memory for tpu_custom_call.1']
    #allocation5 [shape = 'u8[4096]{0}', space=vmem, size = 0x1000, scoped, tag = 'input window, operand 1, single buffered']
    #allocation6 [shape = 's32[1]{0}', space=sflag, size = 0x4, scoped, tag = 'scoped memory for tpu_custom_call.1']
    #allocation7 [shape = 'u8[8192]{0}', space=vmem, size = 0x2000, scoped, tag = 'input window, operand 2, single buffered']
    #allocation8 [shape = 'u8[512]{0}', space=vmem, size = 0x400, scoped, tag = 'input window, operand 3, single buffered']
    #allocation9 [shape = 's32[1]{0}', space=sflag, size = 0x4, scoped, tag = 'scoped memory for tpu_custom_call.1']
    #allocation10 [shape = 'u8[12288]{0}', space=vmem, size = 0x3000, scoped, tag = 'input window, operand 4, single buffered']
    #allocation11 [shape = 'u8[512]{0}', space=vmem, size = 0x400, scoped, tag = 'input window, operand 5, single buffered']
    #allocation12 [shape = 's32[1]{0}', space=sflag, size = 0x4, scoped, tag = 'scoped memory for tpu_custom_call.1']
    #allocation13 [shape = 'u8[131072]{0}', space=vmem, size = 0x20000, scoped, tag = 'input window, operand 6, single buffered']
    #allocation14 [shape = 'u8[131072]{0}', space=vmem, size = 0x20000, scoped, tag = 'input window, operand 7, single buffered']
    #allocation15 [shape = 's32[1]{0}', space=sflag, size = 0x4, scoped, tag = 'scoped memory for tpu_custom_call.1']
    #allocation16 [shape = 'u8[1024]{0}', space=vmem, size = 0x400, scoped, tag = 'input window, operand 8, single buffered']
    #allocation17 [shape = 'u8[131072]{0}', space=vmem, size = 0x20000, scoped, tag = 'input window, operand 9, single buffered']
    #allocation18 [shape = 's32[1]{0}', space=sflag, size = 0x4, scoped, tag = 'scoped memory for tpu_custom_call.1']
    #allocation19 [shape = 'u8[512]{0}', space=vmem, size = 0x400, scoped, tag = 'input window, operand 10, single buffered']
    #allocation20 [shape = 'u8[4096]{0}', space=vmem, size = 0x1000, scoped, tag = 'output window, operand 0, single buffered']
    %16 = vsyncpa [#allocation3], 0
    %17 = vsyncpa [#allocation6], 0
    %18 = vsyncpa [#allocation9], 0
    %19 = vsyncpa [#allocation12], 0
    %20 = vsyncpa [#allocation15], 0
    %21 = vsyncpa [#allocation18], 0
    %22 = vsyncpa [#allocation4], 0
    // Predicated region
    $region2: #{tpu_custom_call.1} parent=1 // pred_check
      _
    $region3: #{tpu_custom_call.1} parent=1 // pred_check_branch
      %24 = sbr.rel (0) target = $region5
    $region4: #{tpu_custom_call.1} parent=1 // pred_region
      %s26 = ssub.s32 128, 128
      %27 = vsyncadd [#allocation3], %s26
      %s29 = sshll.u32 [#allocation2], 4
      %s30 = int_to_ptr.vmem [resolvable:$true] %s29
      %32 = dma.hbm_to_vmem [thread:$0]  %s0, 128, %s30, [#allocation3]
    $region5: #{tpu_custom_call.1} parent=1 // pred_fallthru
      _
    // Predicated region
    $region6: #{tpu_custom_call.1} parent=1 // pred_check
      _
    $region7: #{tpu_custom_call.1} parent=1 // pred_check_branch
      %34 = sbr.rel (0) target = $region9
    $region8: #{tpu_custom_call.1} parent=1 // pred_region
      %s36 = ssub.s32 128, 128
      %37 = vsyncadd [#allocation6], %s36
      %s39 = sshll.u32 [#allocation5], 4
      %s40 = int_to_ptr.vmem [resolvable:$true] %s39
      %42 = dma.hbm_to_vmem [thread:$0]  %s1, 128, %s40, [#allocation6]
    $region9: #{tpu_custom_call.1} parent=1 // pred_fallthru
      _
    // Predicated region
    $region10: #{tpu_custom_call.1} parent=1 // pred_check
      _
    $region11: #{tpu_custom_call.1} parent=1 // pred_check_branch
      %44 = sbr.rel (0) target = $region13
    $region12: #{tpu_custom_call.1} parent=1 // pred_region
      %s46 = ssub.s32 256, 256
      %47 = vsyncadd [#allocation6], %s46
      %s48 = sshll.u32 [#allocation7], 4
      %s49 = int_to_ptr.vmem [resolvable:$true] %s48
      %54 = dma.hbm_to_vmem [thread:$0]  %s2, 256, %s49, [#allocation6], 128, 128, 8
    $region13: #{tpu_custom_call.1} parent=1 // pred_fallthru
      _
    // Predicated region
    $region14: #{tpu_custom_call.1} parent=1 // pred_check
      _
    $region15: #{tpu_custom_call.1} parent=1 // pred_check_branch
      %56 = sbr.rel (0) target = $region17
    $region16: #{tpu_custom_call.1} parent=1 // pred_region
      %s58 = ssub.s32 16, 16
      %59 = vsyncadd [#allocation9], %s58
      %s61 = sshll.u32 [#allocation8], 4
      %s62 = int_to_ptr.vmem [resolvable:$true] %s61
      %64 = dma.hbm_to_vmem [thread:$0]  %s3, 16, %s62, [#allocation9]
    $region17: #{tpu_custom_call.1} parent=1 // pred_fallthru
      _
    // Predicated region
    $region18: #{tpu_custom_call.1} parent=1 // pred_check
      _
    $region19: #{tpu_custom_call.1} parent=1 // pred_check_branch
      %66 = sbr.rel (0) target = $region21
    $region20: #{tpu_custom_call.1} parent=1 // pred_region
      %s68 = ssub.s32 384, 384
      %69 = vsyncadd [#allocation9], %s68
      %s70 = sshll.u32 [#allocation10], 4
      %s71 = int_to_ptr.vmem [resolvable:$true] %s70
      %76 = dma.hbm_to_vmem [thread:$0]  %s4, 384, %s71, [#allocation9], 128, 128, 8
    $region21: #{tpu_custom_call.1} parent=1 // pred_fallthru
      _
    // Predicated region
    $region22: #{tpu_custom_call.1} parent=1 // pred_check
      _
    $region23: #{tpu_custom_call.1} parent=1 // pred_check_branch
      %78 = sbr.rel (0) target = $region25
    $region24: #{tpu_custom_call.1} parent=1 // pred_region
      %s80 = ssub.s32 16, 16
      %81 = vsyncadd [#allocation12], %s80
      %s83 = sshll.u32 [#allocation11], 4
      %s84 = int_to_ptr.vmem [resolvable:$true] %s83
      %86 = dma.hbm_to_vmem [thread:$0]  %s5, 16, %s84, [#allocation12]
    $region25: #{tpu_custom_call.1} parent=1 // pred_fallthru
      _
    // Predicated region
    $region26: #{tpu_custom_call.1} parent=1 // pred_check
      _
    $region27: #{tpu_custom_call.1} parent=1 // pred_check_branch
      %88 = sbr.rel (0) target = $region29
    $region28: #{tpu_custom_call.1} parent=1 // pred_region
      %s90 = ssub.s32 4096, 4096
      %91 = vsyncadd [#allocation12], %s90
      %s92 = sshll.u32 [#allocation13], 4
      %s93 = int_to_ptr.vmem [resolvable:$true] %s92
      %98 = dma.hbm_to_vmem [thread:$0]  %s6, 4096, %s93, [#allocation12], 256, 256, 16
    $region29: #{tpu_custom_call.1} parent=1 // pred_fallthru
      _
    // Predicated region
    $region30: #{tpu_custom_call.1} parent=1 // pred_check
      _
    $region31: #{tpu_custom_call.1} parent=1 // pred_check_branch
      %100 = sbr.rel (0) target = $region33
    $region32: #{tpu_custom_call.1} parent=1 // pred_region
      %s102 = ssub.s32 4096, 4096
      %103 = vsyncadd [#allocation15], %s102
      %s104 = sshll.u32 [#allocation14], 4
      %s105 = int_to_ptr.vmem [resolvable:$true] %s104
      %110 = dma.hbm_to_vmem [thread:$0]  %s7, 4096, %s105, [#allocation15], 256, 256, 16
    $region33: #{tpu_custom_call.1} parent=1 // pred_fallthru
      _
    // Predicated region
    $region34: #{tpu_custom_call.1} parent=1 // pred_check
      _
    $region35: #{tpu_custom_call.1} parent=1 // pred_check_branch
      %112 = sbr.rel (0) target = $region37
    $region36: #{tpu_custom_call.1} parent=1 // pred_region
      %s114 = ssub.s32 32, 32
      %115 = vsyncadd [#allocation15], %s114
      %s117 = sshll.u32 [#allocation16], 4
      %s118 = int_to_ptr.vmem [resolvable:$true] %s117
      %120 = dma.hbm_to_vmem [thread:$0]  %s8, 32, %s118, [#allocation15]
    $region37: #{tpu_custom_call.1} parent=1 // pred_fallthru
      _
    // Predicated region
    $region38: #{tpu_custom_call.1} parent=1 // pred_check
      _
    $region39: #{tpu_custom_call.1} parent=1 // pred_check_branch
      %122 = sbr.rel (0) target = $region41
    $region40: #{tpu_custom_call.1} parent=1 // pred_region
      %s124 = ssub.s32 4096, 4096
      %125 = vsyncadd [#allocation18], %s124
      %s126 = sshll.u32 [#allocation17], 4
      %s127 = int_to_ptr.vmem [resolvable:$true] %s126
      %132 = dma.hbm_to_vmem [thread:$0]  %s9, 4096, %s127, [#allocation18], 128, 128, 8
    $region41: #{tpu_custom_call.1} parent=1 // pred_fallthru
      _
    // Predicated region
    $region42: #{tpu_custom_call.1} parent=1 // pred_check
      _
    $region43: #{tpu_custom_call.1} parent=1 // pred_check_branch
      %134 = sbr.rel (0) target = $region45
    $region44: #{tpu_custom_call.1} parent=1 // pred_region
      %s136 = ssub.s32 16, 16
      %137 = vsyncadd [#allocation18], %s136
      %s139 = sshll.u32 [#allocation19], 4
      %s140 = int_to_ptr.vmem [resolvable:$true] %s139
      %142 = dma.hbm_to_vmem [thread:$0]  %s10, 16, %s140, [#allocation18]
    $region45: #{tpu_custom_call.1} parent=1 // pred_fallthru
      _
    // Predicated region
    $region46: #{tpu_custom_call.1} parent=1 // pred_check
      _
    $region47: #{tpu_custom_call.1} parent=1 // pred_check_branch
      %144 = sbr.rel (0) target = $region49
    $region48: #{tpu_custom_call.1} parent=1 // pred_region
      %145 = dma.done [#allocation3], 128
    $region49: #{tpu_custom_call.1} parent=1 // pred_fallthru
      _
    // Predicated region
    $region50: #{tpu_custom_call.1} parent=1 // pred_check
      _
    $region51: #{tpu_custom_call.1} parent=1 // pred_check_branch
      %147 = sbr.rel (0) target = $region53
    $region52: #{tpu_custom_call.1} parent=1 // pred_region
      %148 = dma.done [#allocation6], 128
    $region53: #{tpu_custom_call.1} parent=1 // pred_fallthru
      _
    // Predicated region
    $region54: #{tpu_custom_call.1} parent=1 // pred_check
      _
    $region55: #{tpu_custom_call.1} parent=1 // pred_check_branch
      %150 = sbr.rel (0) target = $region57
    $region56: #{tpu_custom_call.1} parent=1 // pred_region
      %151 = dma.done [#allocation6], 256
    $region57: #{tpu_custom_call.1} parent=1 // pred_fallthru
      _
    // Predicated region
    $region58: #{tpu_custom_call.1} parent=1 // pred_check
      _
    $region59: #{tpu_custom_call.1} parent=1 // pred_check_branch
      %153 = sbr.rel (0) target = $region61
    $region60: #{tpu_custom_call.1} parent=1 // pred_region
      %154 = dma.done [#allocation9], 16
    $region61: #{tpu_custom_call.1} parent=1 // pred_fallthru
      _
    // Predicated region
    $region62: #{tpu_custom_call.1} parent=1 // pred_check
      _
    $region63: #{tpu_custom_call.1} parent=1 // pred_check_branch
      %156 = sbr.rel (0) target = $region65
    $region64: #{tpu_custom_call.1} parent=1 // pred_region
      %157 = dma.done [#allocation9], 384
    $region65: #{tpu_custom_call.1} parent=1 // pred_fallthru
      _
    // Predicated region
    $region66: #{tpu_custom_call.1} parent=1 // pred_check
      _
    $region67: #{tpu_custom_call.1} parent=1 // pred_check_branch
      %159 = sbr.rel (0) target = $region69
    $region68: #{tpu_custom_call.1} parent=1 // pred_region
      %160 = dma.done [#allocation12], 16
    $region69: #{tpu_custom_call.1} parent=1 // pred_fallthru
      _
    // Predicated region
    $region70: #{tpu_custom_call.1} parent=1 // pred_check
      _
    $region71: #{tpu_custom_call.1} parent=1 // pred_check_branch
      %162 = sbr.rel (0) target = $region73
    $region72: #{tpu_custom_call.1} parent=1 // pred_region
      %163 = dma.done [#allocation12], 4096
    $region73: #{tpu_custom_call.1} parent=1 // pred_fallthru
      _
    // Predicated region
    $region74: #{tpu_custom_call.1} parent=1 // pred_check
      _
    $region75: #{tpu_custom_call.1} parent=1 // pred_check_branch
      %165 = sbr.rel (0) target = $region77
    $region76: #{tpu_custom_call.1} parent=1 // pred_region
      %166 = dma.done [#allocation15], 4096
    $region77: #{tpu_custom_call.1} parent=1 // pred_fallthru
      _
    // Predicated region
    $region78: #{tpu_custom_call.1} parent=1 // pred_check
      _
    $region79: #{tpu_custom_call.1} parent=1 // pred_check_branch
      %168 = sbr.rel (0) target = $region81
    $region80: #{tpu_custom_call.1} parent=1 // pred_region
      %169 = dma.done [#allocation15], 32
    $region81: #{tpu_custom_call.1} parent=1 // pred_fallthru
      _
    // Predicated region
    $region82: #{tpu_custom_call.1} parent=1 // pred_check
      _
    $region83: #{tpu_custom_call.1} parent=1 // pred_check_branch
      %171 = sbr.rel (0) target = $region85
    $region84: #{tpu_custom_call.1} parent=1 // pred_region
      %172 = dma.done [#allocation18], 4096
    $region85: #{tpu_custom_call.1} parent=1 // pred_fallthru
      _
    // Predicated region
    $region86: #{tpu_custom_call.1} parent=1 // pred_check
      _
    $region87: #{tpu_custom_call.1} parent=1 // pred_check_branch
      %174 = sbr.rel (0) target = $region89
    $region88: #{tpu_custom_call.1} parent=1 // pred_region
      %175 = dma.done [#allocation18], 16
    $region89: #{tpu_custom_call.1} parent=1 // pred_fallthru
      _
    %v176 = vld [vmem:[#allocation2] sm:$0xff]
    %v177 = vld [vmem:[#allocation7] sm:$0xff]
    %v178 = vld [vmem:[#allocation7 + $0x8] sm:$0xff]
    %v179 = vld [vmem:[#allocation8] sm:$0x1]
    %v181 = vlaneseq
    %v182 = vshrl.u32 %v181, 7
    %v183 = vsub.s32 0, %v182
    %v184 = vrot.slane %v179, %v183
    %vm186 = vcmask 130048
    %v188 = vsel %vm186, %v176, 0
    %190 = vmatprep.subr.mxu0 0.0
    %191 = vmatpush1.msra.mxu0 %v177
    %192 = vmatprep.subr.mxu0 0.0
    %193 = vmatpush1.msra.mxu0 %v178
    %194 = vmatprep.subr.mxu0 0.0
    %195 = vmatpush1.msra.mxu0 0.0
    %196 = vmatprep.subr.mxu0 0.0
    %197 = vmatpush1.msra.mxu0 0.0
    %198 = vmatprep.subr.mxu0 0.0
    %199 = vmatpush1.msra.mxu0 0.0
    %200 = vmatprep.subr.mxu0 0.0
    %201 = vmatpush1.msra.mxu0 0.0
    %202 = vmatprep.subr.mxu0 0.0
    %203 = vmatpush1.msra.mxu0 0.0
    %204 = vmatprep.subr.mxu0 0.0
    %205 = vmatpush1.msra.mxu0 0.0
    %206 = vmatprep.subr.mxu0 0.0
    %207 = vmatpush1.msra.mxu0 0.0
    %208 = vmatprep.subr.mxu0 0.0
    %209 = vmatpush1.msra.mxu0 0.0
    %210 = vmatprep.subr.mxu0 0.0
    %211 = vmatpush1.msra.mxu0 0.0
    %212 = vmatprep.subr.mxu0 0.0
    %213 = vmatpush1.msra.mxu0 0.0
    %214 = vmatprep.subr.mxu0 0.0
    %215 = vmatpush1.msra.mxu0 0.0
    %216 = vmatprep.subr.mxu0 0.0
    %217 = vmatpush1.msra.mxu0 0.0
    %218 = vmatprep.subr.mxu0 0.0
    %219 = vmatpush1.msra.mxu0 0.0
    %220 = vmatprep.subr.mxu0 0.0
    %221 = vmatpush1.msra.mxu0 0.0
    %222 = vmatprep.subr.mxu0 0.0
    %223 = vmatpush1.msra.mxu0 0.0
    %224 = vmatprep.subr.mxu0 0.0
    %225 = vmatpush1.msra.mxu0 0.0
    %226 = vmatprep.subr.mxu0 0.0
    %227 = vmatpush1.msra.mxu0 0.0
    %228 = vmatprep.subr.mxu0 0.0
    %229 = vmatpush1.msra.mxu0 0.0
    %230 = vmatprep.subr.mxu0 0.0
    %231 = vmatpush1.msra.mxu0 0.0
    %232 = vmatprep.subr.mxu0 0.0
    %233 = vmatpush1.msra.mxu0 0.0
    %234 = vmatprep.subr.mxu0 0.0
    %235 = vmatpush1.msra.mxu0 0.0
    %236 = vmatprep.subr.mxu0 0.0
    %237 = vmatpush1.msra.mxu0 0.0
    %238 = vmatprep.subr.mxu0 0.0
    %239 = vmatpush1.msra.mxu0 0.0
    %240 = vmatprep.subr.mxu0 0.0
    %241 = vmatpush1.msra.mxu0 0.0
    %242 = vmatprep.subr.mxu0 0.0
    %243 = vmatpush1.msra.mxu0 0.0
    %244 = vmatprep.subr.mxu0 0.0
    %245 = vmatpush1.msra.mxu0 0.0
    %246 = vmatprep.subr.mxu0 0.0
    %247 = vmatpush1.msra.mxu0 0.0
    %248 = vmatprep.subr.mxu0 0.0
    %249 = vmatpush1.msra.mxu0 0.0
    %250 = vmatprep.subr.mxu0 0.0
    %251 = vmatpush1.msra.mxu0 0.0
    %252 = vmatprep.subr.mxu0 0.0
    %253 = vmatpush1.msra.mxu0 0.0
    %254 = vmatprep.mubr.f32.mxu0 0.0
    %255 = vmatmul.mubr.f32.gmra.mrb[0].mxu0 %v188
    %v256 = vpop.f32.mrb[0].mxu0
    %v257 = vadd.f32 %v184, %v256
    %v258 = vpop.f32.mrb[0].mxu0
    %259 = vdwg.mxu0
    %v260 = vmax.f32 %v257, 0.0
    %v261 = vld [vmem:[#allocation5] sm:$0xff]
    %v262 = vld [vmem:[#allocation10] sm:$0xff]
    %v263 = vld [vmem:[#allocation10 + $0x8] sm:$0xff]
    %v264 = vld [vmem:[#allocation10 + $0x10] sm:$0xff]
    %v265 = vld [vmem:[#allocation11] sm:$0x1]
    %v267 = vlaneseq
    %v268 = vshrl.u32 %v267, 7
    %v269 = vsub.s32 0, %v268
    %v270 = vrot.slane %v265, %v269
    %vm272 = vcmask 195584
    %v274 = vsel %vm272, %v261, 0
    %276 = vmatprep.subr.mxu0 0.0
    %277 = vmatpush1.msra.mxu0 %v262
    %278 = vmatprep.subr.mxu0 0.0
    %279 = vmatpush1.msra.mxu0 %v263
    %280 = vmatprep.subr.mxu0 0.0
    %281 = vmatpush1.msra.mxu0 %v264
    %282 = vmatprep.subr.mxu0 0.0
    %283 = vmatpush1.msra.mxu0 0.0
    %284 = vmatprep.subr.mxu0 0.0
    %285 = vmatpush1.msra.mxu0 0.0
    %286 = vmatprep.subr.mxu0 0.0
    %287 = vmatpush1.msra.mxu0 0.0
    %288 = vmatprep.subr.mxu0 0.0
    %289 = vmatpush1.msra.mxu0 0.0
    %290 = vmatprep.subr.mxu0 0.0
    %291 = vmatpush1.msra.mxu0 0.0
    %292 = vmatprep.subr.mxu0 0.0
    %293 = vmatpush1.msra.mxu0 0.0
    %294 = vmatprep.subr.mxu0 0.0
    %295 = vmatpush1.msra.mxu0 0.0
    %296 = vmatprep.subr.mxu0 0.0
    %297 = vmatpush1.msra.mxu0 0.0
    %298 = vmatprep.subr.mxu0 0.0
    %299 = vmatpush1.msra.mxu0 0.0
    %300 = vmatprep.subr.mxu0 0.0
    %301 = vmatpush1.msra.mxu0 0.0
    %302 = vmatprep.subr.mxu0 0.0
    %303 = vmatpush1.msra.mxu0 0.0
    %304 = vmatprep.subr.mxu0 0.0
    %305 = vmatpush1.msra.mxu0 0.0
    %306 = vmatprep.subr.mxu0 0.0
    %307 = vmatpush1.msra.mxu0 0.0
    %308 = vmatprep.subr.mxu0 0.0
    %309 = vmatpush1.msra.mxu0 0.0
    %310 = vmatprep.subr.mxu0 0.0
    %311 = vmatpush1.msra.mxu0 0.0
    %312 = vmatprep.subr.mxu0 0.0
    %313 = vmatpush1.msra.mxu0 0.0
    %314 = vmatprep.subr.mxu0 0.0
    %315 = vmatpush1.msra.mxu0 0.0
    %316 = vmatprep.subr.mxu0 0.0
    %317 = vmatpush1.msra.mxu0 0.0
    %318 = vmatprep.subr.mxu0 0.0
    %319 = vmatpush1.msra.mxu0 0.0
    %320 = vmatprep.subr.mxu0 0.0
    %321 = vmatpush1.msra.mxu0 0.0
    %322 = vmatprep.subr.mxu0 0.0
    %323 = vmatpush1.msra.mxu0 0.0
    %324 = vmatprep.subr.mxu0 0.0
    %325 = vmatpush1.msra.mxu0 0.0
    %326 = vmatprep.subr.mxu0 0.0
    %327 = vmatpush1.msra.mxu0 0.0
    %328 = vmatprep.subr.mxu0 0.0
    %329 = vmatpush1.msra.mxu0 0.0
    %330 = vmatprep.subr.mxu0 0.0
    %331 = vmatpush1.msra.mxu0 0.0
    %332 = vmatprep.subr.mxu0 0.0
    %333 = vmatpush1.msra.mxu0 0.0
    %334 = vmatprep.subr.mxu0 0.0
    %335 = vmatpush1.msra.mxu0 0.0
    %336 = vmatprep.subr.mxu0 0.0
    %337 = vmatpush1.msra.mxu0 0.0
    %338 = vmatprep.subr.mxu0 0.0
    %339 = vmatpush1.msra.mxu0 0.0
    %340 = vmatprep.mubr.f32.mxu0 0.0
    %341 = vmatmul.mubr.f32.gmra.mrb[0].mxu0 %v274
    %v342 = vpop.f32.mrb[0].mxu0
    %v343 = vadd.f32 %v270, %v342
    %v344 = vpop.f32.mrb[0].mxu0
    %345 = vdwg.mxu0
    %v346 = vmax.f32 %v343, 0.0
    %v347 = vld [vmem:[#allocation13] sm:$0xff]
    %v348 = vld [vmem:[#allocation13 + $0x8] sm:$0xff]
    %v349 = vld [vmem:[#allocation13 + $0x10] sm:$0xff]
    %v350 = vld [vmem:[#allocation13 + $0x18] sm:$0xff]
    %v351 = vld [vmem:[#allocation13 + $0x20] sm:$0xff]
    %v352 = vld [vmem:[#allocation13 + $0x28] sm:$0xff]
    %v353 = vld [vmem:[#allocation13 + $0x30] sm:$0xff]
    %v354 = vld [vmem:[#allocation13 + $0x38] sm:$0xff]
    %v355 = vld [vmem:[#allocation13 + $0x40] sm:$0xff]
    %v356 = vld [vmem:[#allocation13 + $0x48] sm:$0xff]
    %v357 = vld [vmem:[#allocation13 + $0x50] sm:$0xff]
    %v358 = vld [vmem:[#allocation13 + $0x58] sm:$0xff]
    %v359 = vld [vmem:[#allocation13 + $0x60] sm:$0xff]
    %v360 = vld [vmem:[#allocation13 + $0x68] sm:$0xff]
    %v361 = vld [vmem:[#allocation13 + $0x70] sm:$0xff]
    %v362 = vld [vmem:[#allocation13 + $0x78] sm:$0xff]
    %v363 = vld [vmem:[#allocation13 + $0x80] sm:$0xff]
    %v364 = vld [vmem:[#allocation13 + $0x88] sm:$0xff]
    %v365 = vld [vmem:[#allocation13 + $0x90] sm:$0xff]
    %v366 = vld [vmem:[#allocation13 + $0x98] sm:$0xff]
    %v367 = vld [vmem:[#allocation13 + $0xa0] sm:$0xff]
    %v368 = vld [vmem:[#allocation13 + $0xa8] sm:$0xff]
    %v369 = vld [vmem:[#allocation13 + $0xb0] sm:$0xff]
    %v370 = vld [vmem:[#allocation13 + $0xb8] sm:$0xff]
    %v371 = vld [vmem:[#allocation13 + $0xc0] sm:$0xff]
    %v372 = vld [vmem:[#allocation13 + $0xc8] sm:$0xff]
    %v373 = vld [vmem:[#allocation13 + $0xd0] sm:$0xff]
    %v374 = vld [vmem:[#allocation13 + $0xd8] sm:$0xff]
    %v375 = vld [vmem:[#allocation13 + $0xe0] sm:$0xff]
    %v376 = vld [vmem:[#allocation13 + $0xe8] sm:$0xff]
    %v377 = vld [vmem:[#allocation13 + $0xf0] sm:$0xff]
    %v378 = vld [vmem:[#allocation13 + $0xf8] sm:$0xff]
    %v379 = vld [vmem:[#allocation14] sm:$0xff]
    %v380 = vld [vmem:[#allocation14 + $0x8] sm:$0xff]
    %v381 = vld [vmem:[#allocation14 + $0x10] sm:$0xff]
    %v382 = vld [vmem:[#allocation14 + $0x18] sm:$0xff]
    %v383 = vld [vmem:[#allocation14 + $0x20] sm:$0xff]
    %v384 = vld [vmem:[#allocation14 + $0x28] sm:$0xff]
    %v385 = vld [vmem:[#allocation14 + $0x30] sm:$0xff]
    %v386 = vld [vmem:[#allocation14 + $0x38] sm:$0xff]
    %v387 = vld [vmem:[#allocation14 + $0x40] sm:$0xff]
    %v388 = vld [vmem:[#allocation14 + $0x48] sm:$0xff]
    %v389 = vld [vmem:[#allocation14 + $0x50] sm:$0xff]
    %v390 = vld [vmem:[#allocation14 + $0x58] sm:$0xff]
    %v391 = vld [vmem:[#allocation14 + $0x60] sm:$0xff]
    %v392 = vld [vmem:[#allocation14 + $0x68] sm:$0xff]
    %v393 = vld [vmem:[#allocation14 + $0x70] sm:$0xff]
    %v394 = vld [vmem:[#allocation14 + $0x78] sm:$0xff]
    %v395 = vld [vmem:[#allocation14 + $0x80] sm:$0xff]
    %v396 = vld [vmem:[#allocation14 + $0x88] sm:$0xff]
    %v397 = vld [vmem:[#allocation14 + $0x90] sm:$0xff]
    %v398 = vld [vmem:[#allocation14 + $0x98] sm:$0xff]
    %v399 = vld [vmem:[#allocation14 + $0xa0] sm:$0xff]
    %v400 = vld [vmem:[#allocation14 + $0xa8] sm:$0xff]
    %v401 = vld [vmem:[#allocation14 + $0xb0] sm:$0xff]
    %v402 = vld [vmem:[#allocation14 + $0xb8] sm:$0xff]
    %v403 = vld [vmem:[#allocation14 + $0xc0] sm:$0xff]
    %v404 = vld [vmem:[#allocation14 + $0xc8] sm:$0xff]
    %v405 = vld [vmem:[#allocation14 + $0xd0] sm:$0xff]
    %v406 = vld [vmem:[#allocation14 + $0xd8] sm:$0xff]
    %v407 = vld [vmem:[#allocation14 + $0xe0] sm:$0xff]
    %v408 = vld [vmem:[#allocation14 + $0xe8] sm:$0xff]
    %v409 = vld [vmem:[#allocation14 + $0xf0] sm:$0xff]
    %v410 = vld [vmem:[#allocation14 + $0xf8] sm:$0xff]
    %411 = vmatprep.subr.mxu0 %v380
    %412 = vmatpush1.msra.mxu0 %v379
    %413 = vmatprep.subr.mxu0 %v382
    %414 = vmatpush1.msra.mxu0 %v381
    %415 = vmatprep.subr.mxu0 %v384
    %416 = vmatpush1.msra.mxu0 %v383
    %417 = vmatprep.subr.mxu0 %v386
    %418 = vmatpush1.msra.mxu0 %v385
    %419 = vmatprep.subr.mxu0 %v388
    %420 = vmatpush1.msra.mxu0 %v387
    %421 = vmatprep.subr.mxu0 %v390
    %422 = vmatpush1.msra.mxu0 %v389
    %423 = vmatprep.subr.mxu0 %v392
    %424 = vmatpush1.msra.mxu0 %v391
    %425 = vmatprep.subr.mxu0 %v394
    %426 = vmatpush1.msra.mxu0 %v393
    %427 = vmatprep.subr.mxu0 %v396
    %428 = vmatpush1.msra.mxu0 %v395
    %429 = vmatprep.subr.mxu0 %v398
    %430 = vmatpush1.msra.mxu0 %v397
    %431 = vmatprep.subr.mxu0 %v400
    %432 = vmatpush1.msra.mxu0 %v399
    %433 = vmatprep.subr.mxu0 %v402
    %434 = vmatpush1.msra.mxu0 %v401
    %435 = vmatprep.subr.mxu0 %v404
    %436 = vmatpush1.msra.mxu0 %v403
    %437 = vmatprep.subr.mxu0 %v406
    %438 = vmatpush1.msra.mxu0 %v405
    %439 = vmatprep.subr.mxu0 %v408
    %440 = vmatpush1.msra.mxu0 %v407
    %441 = vmatprep.subr.mxu0 %v410
    %442 = vmatpush1.msra.mxu0 %v409
    %443 = vmatprep.subr.mxu0 0.0
    %444 = vmatpush1.msra.mxu0 0.0
    %445 = vmatprep.subr.mxu0 0.0
    %446 = vmatpush1.msra.mxu0 0.0
    %447 = vmatprep.subr.mxu0 0.0
    %448 = vmatpush1.msra.mxu0 0.0
    %449 = vmatprep.subr.mxu0 0.0
    %450 = vmatpush1.msra.mxu0 0.0
    %451 = vmatprep.subr.mxu0 0.0
    %452 = vmatpush1.msra.mxu0 0.0
    %453 = vmatprep.subr.mxu0 0.0
    %454 = vmatpush1.msra.mxu0 0.0
    %455 = vmatprep.subr.mxu0 0.0
    %456 = vmatpush1.msra.mxu0 0.0
    %457 = vmatprep.subr.mxu0 0.0
    %458 = vmatpush1.msra.mxu0 0.0
    %459 = vmatprep.subr.mxu0 0.0
    %460 = vmatpush1.msra.mxu0 0.0
    %461 = vmatprep.subr.mxu0 0.0
    %462 = vmatpush1.msra.mxu0 0.0
    %463 = vmatprep.subr.mxu0 0.0
    %464 = vmatpush1.msra.mxu0 0.0
    %465 = vmatprep.subr.mxu0 0.0
    %466 = vmatpush1.msra.mxu0 0.0
    %467 = vmatprep.subr.mxu0 0.0
    %468 = vmatpush1.msra.mxu0 0.0
    %469 = vmatprep.subr.mxu0 0.0
    %470 = vmatpush1.msra.mxu0 0.0
    %471 = vmatprep.subr.mxu0 0.0
    %472 = vmatpush1.msra.mxu0 0.0
    %473 = vmatprep.subr.mxu0 0.0
    %474 = vmatpush1.msra.mxu0 0.0
    %475 = vmatprep.mubr.f32.mxu0 0.0
    %476 = vmatmul.mubr.f32.gmra.mrb[0].mxu0 %v346
    %v477 = vpop.f32.mrb[0].mxu0
    %v478 = vadd.f32 0.0, %v477
    %v479 = vpop.f32.mrb[0].mxu0
    %v480 = vadd.f32 0.0, %v479
    %481 = vdwg.mxu0
    %482 = vmatprep.subr.mxu0 %v348
    %483 = vmatpush1.msra.mxu0 %v347
    %484 = vmatprep.subr.mxu0 %v350
    %485 = vmatpush1.msra.mxu0 %v349
    %486 = vmatprep.subr.mxu0 %v352
    %487 = vmatpush1.msra.mxu0 %v351
    %488 = vmatprep.subr.mxu0 %v354
    %489 = vmatpush1.msra.mxu0 %v353
    %490 = vmatprep.subr.mxu0 %v356
    %491 = vmatpush1.msra.mxu0 %v355
    %492 = vmatprep.subr.mxu0 %v358
    %493 = vmatpush1.msra.mxu0 %v357
    %494 = vmatprep.subr.mxu0 %v360
    %495 = vmatpush1.msra.mxu0 %v359
    %496 = vmatprep.subr.mxu0 %v362
    %497 = vmatpush1.msra.mxu0 %v361
    %498 = vmatprep.subr.mxu0 %v364
    %499 = vmatpush1.msra.mxu0 %v363
    %500 = vmatprep.subr.mxu0 %v366
    %501 = vmatpush1.msra.mxu0 %v365
    %502 = vmatprep.subr.mxu0 %v368
    %503 = vmatpush1.msra.mxu0 %v367
    %504 = vmatprep.subr.mxu0 %v370
    %505 = vmatpush1.msra.mxu0 %v369
    %506 = vmatprep.subr.mxu0 %v372
    %507 = vmatpush1.msra.mxu0 %v371
    %508 = vmatprep.subr.mxu0 %v374
    %509 = vmatpush1.msra.mxu0 %v373
    %510 = vmatprep.subr.mxu0 %v376
    %511 = vmatpush1.msra.mxu0 %v375
    %512 = vmatprep.subr.mxu0 %v378
    %513 = vmatpush1.msra.mxu0 %v377
    %514 = vmatprep.subr.mxu0 0.0
    %515 = vmatpush1.msra.mxu0 0.0
    %516 = vmatprep.subr.mxu0 0.0
    %517 = vmatpush1.msra.mxu0 0.0
    %518 = vmatprep.subr.mxu0 0.0
    %519 = vmatpush1.msra.mxu0 0.0
    %520 = vmatprep.subr.mxu0 0.0
    %521 = vmatpush1.msra.mxu0 0.0
    %522 = vmatprep.subr.mxu0 0.0
    %523 = vmatpush1.msra.mxu0 0.0
    %524 = vmatprep.subr.mxu0 0.0
    %525 = vmatpush1.msra.mxu0 0.0
    %526 = vmatprep.subr.mxu0 0.0
    %527 = vmatpush1.msra.mxu0 0.0
    %528 = vmatprep.subr.mxu0 0.0
    %529 = vmatpush1.msra.mxu0 0.0
    %530 = vmatprep.subr.mxu0 0.0
    %531 = vmatpush1.msra.mxu0 0.0
    %532 = vmatprep.subr.mxu0 0.0
    %533 = vmatpush1.msra.mxu0 0.0
    %534 = vmatprep.subr.mxu0 0.0
    %535 = vmatpush1.msra.mxu0 0.0
    %536 = vmatprep.subr.mxu0 0.0
    %537 = vmatpush1.msra.mxu0 0.0
    %538 = vmatprep.subr.mxu0 0.0
    %539 = vmatpush1.msra.mxu0 0.0
    %540 = vmatprep.subr.mxu0 0.0
    %541 = vmatpush1.msra.mxu0 0.0
    %542 = vmatprep.subr.mxu0 0.0
    %543 = vmatpush1.msra.mxu0 0.0
    %544 = vmatprep.subr.mxu0 0.0
    %545 = vmatpush1.msra.mxu0 0.0
    %546 = vmatprep.mubr.f32.mxu0 0.0
    %547 = vmatmul.mubr.f32.gmra.mrb[0].mxu0 %v260
    %v548 = vpop.f32.mrb[0].mxu0
    %v549 = vadd.f32 %v478, %v548
    %v550 = vpop.f32.mrb[0].mxu0
    %v551 = vadd.f32 %v480, %v550
    %552 = vdwg.mxu0
    %v553 = vld [vmem:[#allocation16] sm:$0x3]
    %v555 = vlaneseq
    %v556 = vshrl.u32 %v555, 7
    %v557 = vsub.s32 0, %v556
    %v558 = vrot.slane %v553, %v557
    %v559 = vlaneseq
    %v560 = vshrl.u32 %v559, 7
    %v561 = vsub.s32 1, %v560
    %v562 = vrot.slane %v553, %v561
    %v565 = vadd.f32 %v549, %v558
    %v566 = vadd.f32 %v551, %v562
    %v567 = vmax.f32 %v565, 0.0
    %v568 = vmax.f32 %v566, 0.0
    %v569 = vld [vmem:[#allocation17] sm:$0xff]
    %v570 = vld [vmem:[#allocation17 + $0x8] sm:$0xff]
    %v571 = vld [vmem:[#allocation17 + $0x10] sm:$0xff]
    %v572 = vld [vmem:[#allocation17 + $0x18] sm:$0xff]
    %v573 = vld [vmem:[#allocation17 + $0x20] sm:$0xff]
    %v574 = vld [vmem:[#allocation17 + $0x28] sm:$0xff]
    %v575 = vld [vmem:[#allocation17 + $0x30] sm:$0xff]
    %v576 = vld [vmem:[#allocation17 + $0x38] sm:$0xff]
    %v577 = vld [vmem:[#allocation17 + $0x40] sm:$0xff]
    %v578 = vld [vmem:[#allocation17 + $0x48] sm:$0xff]
    %v579 = vld [vmem:[#allocation17 + $0x50] sm:$0xff]
    %v580 = vld [vmem:[#allocation17 + $0x58] sm:$0xff]
    %v581 = vld [vmem:[#allocation17 + $0x60] sm:$0xff]
    %v582 = vld [vmem:[#allocation17 + $0x68] sm:$0xff]
    %v583 = vld [vmem:[#allocation17 + $0x70] sm:$0xff]
    %v584 = vld [vmem:[#allocation17 + $0x78] sm:$0xff]
    %v585 = vld [vmem:[#allocation17 + $0x80] sm:$0xff]
    %v586 = vld [vmem:[#allocation17 + $0x88] sm:$0xff]
    %v587 = vld [vmem:[#allocation17 + $0x90] sm:$0xff]
    %v588 = vld [vmem:[#allocation17 + $0x98] sm:$0xff]
    %v589 = vld [vmem:[#allocation17 + $0xa0] sm:$0xff]
    %v590 = vld [vmem:[#allocation17 + $0xa8] sm:$0xff]
    %v591 = vld [vmem:[#allocation17 + $0xb0] sm:$0xff]
    %v592 = vld [vmem:[#allocation17 + $0xb8] sm:$0xff]
    %v593 = vld [vmem:[#allocation17 + $0xc0] sm:$0xff]
    %v594 = vld [vmem:[#allocation17 + $0xc8] sm:$0xff]
    %v595 = vld [vmem:[#allocation17 + $0xd0] sm:$0xff]
    %v596 = vld [vmem:[#allocation17 + $0xd8] sm:$0xff]
    %v597 = vld [vmem:[#allocation17 + $0xe0] sm:$0xff]
    %v598 = vld [vmem:[#allocation17 + $0xe8] sm:$0xff]
    %v599 = vld [vmem:[#allocation17 + $0xf0] sm:$0xff]
    %v600 = vld [vmem:[#allocation17 + $0xf8] sm:$0xff]
    %v601 = vld [vmem:[#allocation19] sm:$0x1]
    %v603 = vlaneseq
    %v604 = vshrl.u32 %v603, 7
    %v605 = vsub.s32 0, %v604
    %v606 = vrot.slane %v601, %v605
    %608 = vmatprep.subr.mxu0 0.0
    %609 = vmatpush1.msra.mxu0 %v569
    %610 = vmatprep.subr.mxu0 0.0
    %611 = vmatpush1.msra.mxu0 %v570
    %612 = vmatprep.subr.mxu0 0.0
    %613 = vmatpush1.msra.mxu0 %v571
    %614 = vmatprep.subr.mxu0 0.0
    %615 = vmatpush1.msra.mxu0 %v572
    %616 = vmatprep.subr.mxu0 0.0
    %617 = vmatpush1.msra.mxu0 %v573
    %618 = vmatprep.subr.mxu0 0.0
    %619 = vmatpush1.msra.mxu0 %v574
    %620 = vmatprep.subr.mxu0 0.0
    %621 = vmatpush1.msra.mxu0 %v575
    %622 = vmatprep.subr.mxu0 0.0
    %623 = vmatpush1.msra.mxu0 %v576
    %624 = vmatprep.subr.mxu0 0.0
    %625 = vmatpush1.msra.mxu0 %v577
    %626 = vmatprep.subr.mxu0 0.0
    %627 = vmatpush1.msra.mxu0 %v578
    %628 = vmatprep.subr.mxu0 0.0
    %629 = vmatpush1.msra.mxu0 %v579
    %630 = vmatprep.subr.mxu0 0.0
    %631 = vmatpush1.msra.mxu0 %v580
    %632 = vmatprep.subr.mxu0 0.0
    %633 = vmatpush1.msra.mxu0 %v581
    %634 = vmatprep.subr.mxu0 0.0
    %635 = vmatpush1.msra.mxu0 %v582
    %636 = vmatprep.subr.mxu0 0.0
    %637 = vmatpush1.msra.mxu0 %v583
    %638 = vmatprep.subr.mxu0 0.0
    %639 = vmatpush1.msra.mxu0 %v584
    %640 = vmatprep.subr.mxu0 0.0
    %641 = vmatpush1.msra.mxu0 %v585
    %642 = vmatprep.subr.mxu0 0.0
    %643 = vmatpush1.msra.mxu0 %v586
    %644 = vmatprep.subr.mxu0 0.0
    %645 = vmatpush1.msra.mxu0 %v587
    %646 = vmatprep.subr.mxu0 0.0
    %647 = vmatpush1.msra.mxu0 %v588
    %648 = vmatprep.subr.mxu0 0.0
    %649 = vmatpush1.msra.mxu0 %v589
    %650 = vmatprep.subr.mxu0 0.0
    %651 = vmatpush1.msra.mxu0 %v590
    %652 = vmatprep.subr.mxu0 0.0
    %653 = vmatpush1.msra.mxu0 %v591
    %654 = vmatprep.subr.mxu0 0.0
    %655 = vmatpush1.msra.mxu0 %v592
    %656 = vmatprep.subr.mxu0 0.0
    %657 = vmatpush1.msra.mxu0 %v593
    %658 = vmatprep.subr.mxu0 0.0
    %659 = vmatpush1.msra.mxu0 %v594
    %660 = vmatprep.subr.mxu0 0.0
    %661 = vmatpush1.msra.mxu0 %v595
    %662 = vmatprep.subr.mxu0 0.0
    %663 = vmatpush1.msra.mxu0 %v596
    %664 = vmatprep.subr.mxu0 0.0
    %665 = vmatpush1.msra.mxu0 %v597
    %666 = vmatprep.subr.mxu0 0.0
    %667 = vmatpush1.msra.mxu0 %v598
    %668 = vmatprep.subr.mxu0 0.0
    %669 = vmatpush1.msra.mxu0 %v599
    %670 = vmatprep.subr.mxu0 0.0
    %671 = vmatpush1.msra.mxu0 %v600
    %672 = vmatprep.mubr.f32.mxu0 %v568
    %673 = vmatmul.mubr.f32.gmra.mrb[0].mxu0 %v567
    %v674 = vpop.f32.mrb[0].mxu0
    %v675 = vadd.f32 %v606, %v674
    %v676 = vpop.f32.mrb[0].mxu0
    %677 = vdwg.mxu0
    %678 = vst [vmem:[#allocation20] sm:$0xff] %v675
    // Predicated region
    $region90: #{tpu_custom_call.1} parent=1 // pred_check
      _
    $region91: #{tpu_custom_call.1} parent=1 // pred_check_branch
      %680 = sbr.rel (0) target = $region93
    $region92: #{tpu_custom_call.1} parent=1 // pred_region
      %s682 = ssub.s32 128, 128
      %683 = vsyncadd [#allocation4], %s682
      %s685 = sshll.u32 [#allocation20], 4
      %s686 = int_to_ptr.vmem [resolvable:$true] %s685
      %688 = dma.vmem_to_hbm [thread:$0]  %s686, 128, %s11, [#allocation4]
    $region93: #{tpu_custom_call.1} parent=1 // pred_fallthru
      _
    // Predicated region
    $region94: #{tpu_custom_call.1} parent=1 // pred_check
      _
    $region95: #{tpu_custom_call.1} parent=1 // pred_check_branch
      %690 = sbr.rel (0) target = $region97
    $region96: #{tpu_custom_call.1} parent=1 // pred_region
      %691 = dma.done [#allocation4], 128
    $region97: #{tpu_custom_call.1} parent=1 // pred_fallthru
      _
    %692 = vsyncpa [#allocation3], 1
    %693 = vsyncpa [#allocation6], 1
    %694 = vsyncpa [#allocation9], 1
    %695 = vsyncpa [#allocation12], 1
    %696 = vsyncpa [#allocation15], 1
    %697 = vsyncpa [#allocation18], 1
    %698 = vsyncpa [#allocation4], 1

// kernel: tpu_custom_call.1
$region0: #{tpu_custom_call.1}
  #allocation0 [shape = 'u32[]', space=smem, size = 0x4, offset = 0x4, fixed_abs, tag = 'smem constant byte address 0x4 - core index']
  #allocation1 [shape = 'u32[144,128]{1,0:T(1,128)}', space=vmem, size = 0x12000, scoped, tag = 'internal scratch']
  %s0 = inlined_call_operand.hbm [shape: f32[8,16], index: 0, kind: input, shape index: {}]
  %s1 = inlined_call_operand.hbm [shape: f32[8,24], index: 1, kind: input, shape index: {}]
  %s2 = inlined_call_operand.hbm [shape: f32[16,128], index: 2, kind: input, shape index: {}]
  %s3 = inlined_call_operand.hbm [shape: f32[1,128], index: 3, kind: input, shape index: {}]
  %s4 = inlined_call_operand.hbm [shape: f32[24,128], index: 4, kind: input, shape index: {}]
  %s5 = inlined_call_operand.hbm [shape: f32[1,128], index: 5, kind: input, shape index: {}]
  %s6 = inlined_call_operand.hbm [shape: f32[128,256], index: 6, kind: input, shape index: {}]
  %s7 = inlined_call_operand.hbm [shape: f32[128,256], index: 7, kind: input, shape index: {}]
  %s8 = inlined_call_operand.hbm [shape: f32[1,256], index: 8, kind: input, shape index: {}]
  %s9 = inlined_call_operand.hbm [shape: f32[256,128], index: 9, kind: input, shape index: {}]
  %s10 = inlined_call_operand.hbm [shape: f32[1,128], index: 10, kind: input, shape index: {}]
  %s11 = inlined_call_operand.hbm [shape: f32[8,128], index: 11, kind: output, shape index: {}]
  %s12 = sld [smem:[#allocation0]]
  $region98: #{tpu_custom_call.1} parent=0
    _
  %s14 = ssub.s32 1, %s12
  %s15 = scalar_select 0, %s14, %s12
  $region1: #{tpu_custom_call.1} parent=0
    #allocation2 [shape = 'u8[4096]{0}', space=vmem, size = 0x1000, scoped, tag = 'input window, operand 0, single buffered']
    #allocation3 [shape = 's32[1]{0}', space=sflag, size = 0x4, scoped, tag = 'scoped memory for tpu_custom_call.1']
    #allocation4 [shape = 's32[1]{0}', space=sflag, size = 0x4, scoped, tag = 'scoped memory for tpu_custom_call.1']
    #allocation5 [shape = 'u8[4096]{0}', space=vmem, size = 0x1000, scoped, tag = 'input window, operand 1, single buffered']
    #allocation6 [shape = 's32[1]{0}', space=sflag, size = 0x4, scoped, tag = 'scoped memory for tpu_custom_call.1']
    #allocation7 [shape = 'u8[8192]{0}', space=vmem, size = 0x2000, scoped, tag = 'input window, operand 2, single buffered']
    #allocation8 [shape = 'u8[512]{0}', space=vmem, size = 0x400, scoped, tag = 'input window, operand 3, single buffered']
    #allocation9 [shape = 's32[1]{0}', space=sflag, size = 0x4, scoped, tag = 'scoped memory for tpu_custom_call.1']
    #allocation10 [shape = 'u8[12288]{0}', space=vmem, size = 0x3000, scoped, tag = 'input window, operand 4, single buffered']
    #allocation11 [shape = 'u8[512]{0}', space=vmem, size = 0x400, scoped, tag = 'input window, operand 5, single buffered']
    #allocation12 [shape = 's32[1]{0}', space=sflag, size = 0x4, scoped, tag = 'scoped memory for tpu_custom_call.1']
    #allocation13 [shape = 'u8[131072]{0}', space=vmem, size = 0x20000, scoped, tag = 'input window, operand 6, single buffered']
    #allocation14 [shape = 'u8[131072]{0}', space=vmem, size = 0x20000, scoped, tag = 'input window, operand 7, single buffered']
    #allocation15 [shape = 's32[1]{0}', space=sflag, size = 0x4, scoped, tag = 'scoped memory for tpu_custom_call.1']
    #allocation16 [shape = 'u8[1024]{0}', space=vmem, size = 0x400, scoped, tag = 'input window, operand 8, single buffered']
    #allocation17 [shape = 'u8[131072]{0}', space=vmem, size = 0x20000, scoped, tag = 'input window, operand 9, single buffered']
    #allocation18 [shape = 's32[1]{0}', space=sflag, size = 0x4, scoped, tag = 'scoped memory for tpu_custom_call.1']
    #allocation19 [shape = 'u8[512]{0}', space=vmem, size = 0x400, scoped, tag = 'input window, operand 10, single buffered']
    #allocation20 [shape = 'u8[4096]{0}', space=vmem, size = 0x1000, scoped, tag = 'output window, operand 0, single buffered']
    %16 = vsyncpa [#allocation3], 0
    %17 = vsyncpa [#allocation6], 0
    %18 = vsyncpa [#allocation9], 0
    %19 = vsyncpa [#allocation12], 0
    %20 = vsyncpa [#allocation15], 0
    %21 = vsyncpa [#allocation18], 0
    %22 = vsyncpa [#allocation4], 0
    // Predicated region
    $region2: #{tpu_custom_call.1} parent=1 // pred_check
      _
    $region3: #{tpu_custom_call.1} parent=1 // pred_check_branch
      %24 = sbr.rel (0) target = $region5
    $region4: #{tpu_custom_call.1} parent=1 // pred_region
      %s26 = ssub.s32 128, 128
      %27 = vsyncadd [#allocation3], %s26
      %s29 = sshll.u32 [#allocation2], 4
      %s30 = int_to_ptr.vmem [resolvable:$true] %s29
      %32 = dma.hbm_to_vmem [thread:$0]  %s0, 128, %s30, [#allocation3]
    $region5: #{tpu_custom_call.1} parent=1 // pred_fallthru
      _
    // Predicated region
    $region6: #{tpu_custom_call.1} parent=1 // pred_check
      _
    $region7: #{tpu_custom_call.1} parent=1 // pred_check_branch
      %34 = sbr.rel (0) target = $region9
    $region8: #{tpu_custom_call.1} parent=1 // pred_region
      %s36 = ssub.s32 128, 128
      %37 = vsyncadd [#allocation6], %s36
      %s39 = sshll.u32 [#allocation5], 4
      %s40 = int_to_ptr.vmem [resolvable:$true] %s39
      %42 = dma.hbm_to_vmem [thread:$0]  %s1, 128, %s40, [#allocation6]
    $region9: #{tpu_custom_call.1} parent=1 // pred_fallthru
      _
    // Predicated region
    $region10: #{tpu_custom_call.1} parent=1 // pred_check
      _
    $region11: #{tpu_custom_call.1} parent=1 // pred_check_branch
      %44 = sbr.rel (0) target = $region13
    $region12: #{tpu_custom_call.1} parent=1 // pred_region
      %s46 = ssub.s32 256, 256
      %47 = vsyncadd [#allocation6], %s46
      %s48 = sshll.u32 [#allocation7], 4
      %s49 = int_to_ptr.vmem [resolvable:$true] %s48
      %54 = dma.hbm_to_vmem [thread:$0]  %s2, 256, %s49, [#allocation6], 128, 128, 8
    $region13: #{tpu_custom_call.1} parent=1 // pred_fallthru
      _
    // Predicated region
    $region14: #{tpu_custom_call.1} parent=1 // pred_check
      _
    $region15: #{tpu_custom_call.1} parent=1 // pred_check_branch
      %56 = sbr.rel (0) target = $region17
    $region16: #{tpu_custom_call.1} parent=1 // pred_region
      %s58 = ssub.s32 16, 16
      %59 = vsyncadd [#allocation9], %s58
      %s61 = sshll.u32 [#allocation8], 4
      %s62 = int_to_ptr.vmem [resolvable:$true] %s61
      %64 = dma.hbm_to_vmem [thread:$0]  %s3, 16, %s62, [#allocation9]
    $region17: #{tpu_custom_call.1} parent=1 // pred_fallthru
      _
    // Predicated region
    $region18: #{tpu_custom_call.1} parent=1 // pred_check
      _
    $region19: #{tpu_custom_call.1} parent=1 // pred_check_branch
      %66 = sbr.rel (0) target = $region21
    $region20: #{tpu_custom_call.1} parent=1 // pred_region
      %s68 = ssub.s32 384, 384
      %69 = vsyncadd [#allocation9], %s68
      %s70 = sshll.u32 [#allocation10], 4
      %s71 = int_to_ptr.vmem [resolvable:$true] %s70
      %76 = dma.hbm_to_vmem [thread:$0]  %s4, 384, %s71, [#allocation9], 128, 128, 8
    $region21: #{tpu_custom_call.1} parent=1 // pred_fallthru
      _
    // Predicated region
    $region22: #{tpu_custom_call.1} parent=1 // pred_check
      _
    $region23: #{tpu_custom_call.1} parent=1 // pred_check_branch
      %78 = sbr.rel (0) target = $region25
    $region24: #{tpu_custom_call.1} parent=1 // pred_region
      %s80 = ssub.s32 16, 16
      %81 = vsyncadd [#allocation12], %s80
      %s83 = sshll.u32 [#allocation11], 4
      %s84 = int_to_ptr.vmem [resolvable:$true] %s83
      %86 = dma.hbm_to_vmem [thread:$0]  %s5, 16, %s84, [#allocation12]
    $region25: #{tpu_custom_call.1} parent=1 // pred_fallthru
      _
    // Predicated region
    $region26: #{tpu_custom_call.1} parent=1 // pred_check
      _
    $region27: #{tpu_custom_call.1} parent=1 // pred_check_branch
      %88 = sbr.rel (0) target = $region29
    $region28: #{tpu_custom_call.1} parent=1 // pred_region
      %s90 = ssub.s32 4096, 4096
      %91 = vsyncadd [#allocation12], %s90
      %s92 = sshll.u32 [#allocation13], 4
      %s93 = int_to_ptr.vmem [resolvable:$true] %s92
      %98 = dma.hbm_to_vmem [thread:$0]  %s6, 4096, %s93, [#allocation12], 256, 256, 16
    $region29: #{tpu_custom_call.1} parent=1 // pred_fallthru
      _
    // Predicated region
    $region30: #{tpu_custom_call.1} parent=1 // pred_check
      _
    $region31: #{tpu_custom_call.1} parent=1 // pred_check_branch
      %100 = sbr.rel (0) target = $region33
    $region32: #{tpu_custom_call.1} parent=1 // pred_region
      %s102 = ssub.s32 4096, 4096
      %103 = vsyncadd [#allocation15], %s102
      %s104 = sshll.u32 [#allocation14], 4
      %s105 = int_to_ptr.vmem [resolvable:$true] %s104
      %110 = dma.hbm_to_vmem [thread:$0]  %s7, 4096, %s105, [#allocation15], 256, 256, 16
    $region33: #{tpu_custom_call.1} parent=1 // pred_fallthru
      _
    // Predicated region
    $region34: #{tpu_custom_call.1} parent=1 // pred_check
      _
    $region35: #{tpu_custom_call.1} parent=1 // pred_check_branch
      %112 = sbr.rel (0) target = $region37
    $region36: #{tpu_custom_call.1} parent=1 // pred_region
      %s114 = ssub.s32 32, 32
      %115 = vsyncadd [#allocation15], %s114
      %s117 = sshll.u32 [#allocation16], 4
      %s118 = int_to_ptr.vmem [resolvable:$true] %s117
      %120 = dma.hbm_to_vmem [thread:$0]  %s8, 32, %s118, [#allocation15]
    $region37: #{tpu_custom_call.1} parent=1 // pred_fallthru
      _
    // Predicated region
    $region38: #{tpu_custom_call.1} parent=1 // pred_check
      _
    $region39: #{tpu_custom_call.1} parent=1 // pred_check_branch
      %122 = sbr.rel (0) target = $region41
    $region40: #{tpu_custom_call.1} parent=1 // pred_region
      %s124 = ssub.s32 4096, 4096
      %125 = vsyncadd [#allocation18], %s124
      %s126 = sshll.u32 [#allocation17], 4
      %s127 = int_to_ptr.vmem [resolvable:$true] %s126
      %132 = dma.hbm_to_vmem [thread:$0]  %s9, 4096, %s127, [#allocation18], 128, 128, 8
    $region41: #{tpu_custom_call.1} parent=1 // pred_fallthru
      _
    // Predicated region
    $region42: #{tpu_custom_call.1} parent=1 // pred_check
      _
    $region43: #{tpu_custom_call.1} parent=1 // pred_check_branch
      %134 = sbr.rel (0) target = $region45
    $region44: #{tpu_custom_call.1} parent=1 // pred_region
      %s136 = ssub.s32 16, 16
      %137 = vsyncadd [#allocation18], %s136
      %s139 = sshll.u32 [#allocation19], 4
      %s140 = int_to_ptr.vmem [resolvable:$true] %s139
      %142 = dma.hbm_to_vmem [thread:$0]  %s10, 16, %s140, [#allocation18]
    $region45: #{tpu_custom_call.1} parent=1 // pred_fallthru
      _
    // Predicated region
    $region46: #{tpu_custom_call.1} parent=1 // pred_check
      _
    $region47: #{tpu_custom_call.1} parent=1 // pred_check_branch
      %144 = sbr.rel (0) target = $region49
    $region48: #{tpu_custom_call.1} parent=1 // pred_region
      %145 = dma.done [#allocation3], 128
    $region49: #{tpu_custom_call.1} parent=1 // pred_fallthru
      _
    // Predicated region
    $region50: #{tpu_custom_call.1} parent=1 // pred_check
      _
    $region51: #{tpu_custom_call.1} parent=1 // pred_check_branch
      %147 = sbr.rel (0) target = $region53
    $region52: #{tpu_custom_call.1} parent=1 // pred_region
      %148 = dma.done [#allocation6], 128
    $region53: #{tpu_custom_call.1} parent=1 // pred_fallthru
      _
    // Predicated region
    $region54: #{tpu_custom_call.1} parent=1 // pred_check
      _
    $region55: #{tpu_custom_call.1} parent=1 // pred_check_branch
      %150 = sbr.rel (0) target = $region57
    $region56: #{tpu_custom_call.1} parent=1 // pred_region
      %151 = dma.done [#allocation6], 256
    $region57: #{tpu_custom_call.1} parent=1 // pred_fallthru
      _
    // Predicated region
    $region58: #{tpu_custom_call.1} parent=1 // pred_check
      _
    $region59: #{tpu_custom_call.1} parent=1 // pred_check_branch
      %153 = sbr.rel (0) target = $region61
    $region60: #{tpu_custom_call.1} parent=1 // pred_region
      %154 = dma.done [#allocation9], 16
    $region61: #{tpu_custom_call.1} parent=1 // pred_fallthru
      _
    // Predicated region
    $region62: #{tpu_custom_call.1} parent=1 // pred_check
      _
    $region63: #{tpu_custom_call.1} parent=1 // pred_check_branch
      %156 = sbr.rel (0) target = $region65
    $region64: #{tpu_custom_call.1} parent=1 // pred_region
      %157 = dma.done [#allocation9], 384
    $region65: #{tpu_custom_call.1} parent=1 // pred_fallthru
      _
    // Predicated region
    $region66: #{tpu_custom_call.1} parent=1 // pred_check
      _
    $region67: #{tpu_custom_call.1} parent=1 // pred_check_branch
      %159 = sbr.rel (0) target = $region69
    $region68: #{tpu_custom_call.1} parent=1 // pred_region
      %160 = dma.done [#allocation12], 16
    $region69: #{tpu_custom_call.1} parent=1 // pred_fallthru
      _
    // Predicated region
    $region70: #{tpu_custom_call.1} parent=1 // pred_check
      _
    $region71: #{tpu_custom_call.1} parent=1 // pred_check_branch
      %162 = sbr.rel (0) target = $region73
    $region72: #{tpu_custom_call.1} parent=1 // pred_region
      %163 = dma.done [#allocation12], 4096
    $region73: #{tpu_custom_call.1} parent=1 // pred_fallthru
      _
    // Predicated region
    $region74: #{tpu_custom_call.1} parent=1 // pred_check
      _
    $region75: #{tpu_custom_call.1} parent=1 // pred_check_branch
      %165 = sbr.rel (0) target = $region77
    $region76: #{tpu_custom_call.1} parent=1 // pred_region
      %166 = dma.done [#allocation15], 4096
    $region77: #{tpu_custom_call.1} parent=1 // pred_fallthru
      _
    // Predicated region
    $region78: #{tpu_custom_call.1} parent=1 // pred_check
      _
    $region79: #{tpu_custom_call.1} parent=1 // pred_check_branch
      %168 = sbr.rel (0) target = $region81
    $region80: #{tpu_custom_call.1} parent=1 // pred_region
      %169 = dma.done [#allocation15], 32
    $region81: #{tpu_custom_call.1} parent=1 // pred_fallthru
      _
    // Predicated region
    $region82: #{tpu_custom_call.1} parent=1 // pred_check
      _
    $region83: #{tpu_custom_call.1} parent=1 // pred_check_branch
      %171 = sbr.rel (0) target = $region85
    $region84: #{tpu_custom_call.1} parent=1 // pred_region
      %172 = dma.done [#allocation18], 4096
    $region85: #{tpu_custom_call.1} parent=1 // pred_fallthru
      _
    // Predicated region
    $region86: #{tpu_custom_call.1} parent=1 // pred_check
      _
    $region87: #{tpu_custom_call.1} parent=1 // pred_check_branch
      %174 = sbr.rel (0) target = $region89
    $region88: #{tpu_custom_call.1} parent=1 // pred_region
      %175 = dma.done [#allocation18], 16
    $region89: #{tpu_custom_call.1} parent=1 // pred_fallthru
      _
    %v176 = vld [vmem:[#allocation2] sm:$0xff]
    %v177 = vld [vmem:[#allocation7] sm:$0xff]
    %v178 = vld [vmem:[#allocation7 + $0x8] sm:$0xff]
    %v179 = vld [vmem:[#allocation8] sm:$0x1]
    %v181 = vlaneseq
    %v182 = vshrl.u32 %v181, 7
    %v183 = vsub.s32 0, %v182
    %v184 = vrot.slane %v179, %v183
    %vm186 = vcmask 130048
    %v188 = vsel %vm186, %v176, 0
    %190 = vmatprep.subr.mxu0 0.0
    %191 = vmatpush1.msra.mxu0 %v177
    %192 = vmatprep.subr.mxu0 0.0
    %193 = vmatpush1.msra.mxu0 %v178
    %194 = vmatprep.subr.mxu0 0.0
    %195 = vmatpush1.msra.mxu0 0.0
    %196 = vmatprep.subr.mxu0 0.0
    %197 = vmatpush1.msra.mxu0 0.0
    %198 = vmatprep.subr.mxu0 0.0
    %199 = vmatpush1.msra.mxu0 0.0
    %200 = vmatprep.subr.mxu0 0.0
    %201 = vmatpush1.msra.mxu0 0.0
    %202 = vmatprep.subr.mxu0 0.0
    %203 = vmatpush1.msra.mxu0 0.0
    %204 = vmatprep.subr.mxu0 0.0
    %205 = vmatpush1.msra.mxu0 0.0
    %206 = vmatprep.subr.mxu0 0.0
    %207 = vmatpush1.msra.mxu0 0.0
    %208 = vmatprep.subr.mxu0 0.0
    %209 = vmatpush1.msra.mxu0 0.0
    %210 = vmatprep.subr.mxu0 0.0
    %211 = vmatpush1.msra.mxu0 0.0
    %212 = vmatprep.subr.mxu0 0.0
    %213 = vmatpush1.msra.mxu0 0.0
    %214 = vmatprep.subr.mxu0 0.0
    %215 = vmatpush1.msra.mxu0 0.0
    %216 = vmatprep.subr.mxu0 0.0
    %217 = vmatpush1.msra.mxu0 0.0
    %218 = vmatprep.subr.mxu0 0.0
    %219 = vmatpush1.msra.mxu0 0.0
    %220 = vmatprep.subr.mxu0 0.0
    %221 = vmatpush1.msra.mxu0 0.0
    %222 = vmatprep.subr.mxu0 0.0
    %223 = vmatpush1.msra.mxu0 0.0
    %224 = vmatprep.subr.mxu0 0.0
    %225 = vmatpush1.msra.mxu0 0.0
    %226 = vmatprep.subr.mxu0 0.0
    %227 = vmatpush1.msra.mxu0 0.0
    %228 = vmatprep.subr.mxu0 0.0
    %229 = vmatpush1.msra.mxu0 0.0
    %230 = vmatprep.subr.mxu0 0.0
    %231 = vmatpush1.msra.mxu0 0.0
    %232 = vmatprep.subr.mxu0 0.0
    %233 = vmatpush1.msra.mxu0 0.0
    %234 = vmatprep.subr.mxu0 0.0
    %235 = vmatpush1.msra.mxu0 0.0
    %236 = vmatprep.subr.mxu0 0.0
    %237 = vmatpush1.msra.mxu0 0.0
    %238 = vmatprep.subr.mxu0 0.0
    %239 = vmatpush1.msra.mxu0 0.0
    %240 = vmatprep.subr.mxu0 0.0
    %241 = vmatpush1.msra.mxu0 0.0
    %242 = vmatprep.subr.mxu0 0.0
    %243 = vmatpush1.msra.mxu0 0.0
    %244 = vmatprep.subr.mxu0 0.0
    %245 = vmatpush1.msra.mxu0 0.0
    %246 = vmatprep.subr.mxu0 0.0
    %247 = vmatpush1.msra.mxu0 0.0
    %248 = vmatprep.subr.mxu0 0.0
    %249 = vmatpush1.msra.mxu0 0.0
    %250 = vmatprep.subr.mxu0 0.0
    %251 = vmatpush1.msra.mxu0 0.0
    %252 = vmatprep.subr.mxu0 0.0
    %253 = vmatpush1.msra.mxu0 0.0
    %254 = vmatprep.mubr.f32.mxu0 0.0
    %255 = vmatmul.mubr.f32.gmra.mrb[0].mxu0 %v188
    %v256 = vpop.f32.mrb[0].mxu0
    %v257 = vadd.f32 %v184, %v256
    %v258 = vpop.f32.mrb[0].mxu0
    %259 = vdwg.mxu0
    %v260 = vmax.f32 %v257, 0.0
    %v261 = vld [vmem:[#allocation5] sm:$0xff]
    %v262 = vld [vmem:[#allocation10] sm:$0xff]
    %v263 = vld [vmem:[#allocation10 + $0x8] sm:$0xff]
    %v264 = vld [vmem:[#allocation10 + $0x10] sm:$0xff]
    %v265 = vld [vmem:[#allocation11] sm:$0x1]
    %v267 = vlaneseq
    %v268 = vshrl.u32 %v267, 7
    %v269 = vsub.s32 0, %v268
    %v270 = vrot.slane %v265, %v269
    %vm272 = vcmask 195584
    %v274 = vsel %vm272, %v261, 0
    %276 = vmatprep.subr.mxu0 0.0
    %277 = vmatpush1.msra.mxu0 %v262
    %278 = vmatprep.subr.mxu0 0.0
    %279 = vmatpush1.msra.mxu0 %v263
    %280 = vmatprep.subr.mxu0 0.0
    %281 = vmatpush1.msra.mxu0 %v264
    %282 = vmatprep.subr.mxu0 0.0
    %283 = vmatpush1.msra.mxu0 0.0
    %284 = vmatprep.subr.mxu0 0.0
    %285 = vmatpush1.msra.mxu0 0.0
    %286 = vmatprep.subr.mxu0 0.0
    %287 = vmatpush1.msra.mxu0 0.0
    %288 = vmatprep.subr.mxu0 0.0
    %289 = vmatpush1.msra.mxu0 0.0
    %290 = vmatprep.subr.mxu0 0.0
    %291 = vmatpush1.msra.mxu0 0.0
    %292 = vmatprep.subr.mxu0 0.0
    %293 = vmatpush1.msra.mxu0 0.0
    %294 = vmatprep.subr.mxu0 0.0
    %295 = vmatpush1.msra.mxu0 0.0
    %296 = vmatprep.subr.mxu0 0.0
    %297 = vmatpush1.msra.mxu0 0.0
    %298 = vmatprep.subr.mxu0 0.0
    %299 = vmatpush1.msra.mxu0 0.0
    %300 = vmatprep.subr.mxu0 0.0
    %301 = vmatpush1.msra.mxu0 0.0
    %302 = vmatprep.subr.mxu0 0.0
    %303 = vmatpush1.msra.mxu0 0.0
    %304 = vmatprep.subr.mxu0 0.0
    %305 = vmatpush1.msra.mxu0 0.0
    %306 = vmatprep.subr.mxu0 0.0
    %307 = vmatpush1.msra.mxu0 0.0
    %308 = vmatprep.subr.mxu0 0.0
    %309 = vmatpush1.msra.mxu0 0.0
    %310 = vmatprep.subr.mxu0 0.0
    %311 = vmatpush1.msra.mxu0 0.0
    %312 = vmatprep.subr.mxu0 0.0
    %313 = vmatpush1.msra.mxu0 0.0
    %314 = vmatprep.subr.mxu0 0.0
    %315 = vmatpush1.msra.mxu0 0.0
    %316 = vmatprep.subr.mxu0 0.0
    %317 = vmatpush1.msra.mxu0 0.0
    %318 = vmatprep.subr.mxu0 0.0
    %319 = vmatpush1.msra.mxu0 0.0
    %320 = vmatprep.subr.mxu0 0.0
    %321 = vmatpush1.msra.mxu0 0.0
    %322 = vmatprep.subr.mxu0 0.0
    %323 = vmatpush1.msra.mxu0 0.0
    %324 = vmatprep.subr.mxu0 0.0
    %325 = vmatpush1.msra.mxu0 0.0
    %326 = vmatprep.subr.mxu0 0.0
    %327 = vmatpush1.msra.mxu0 0.0
    %328 = vmatprep.subr.mxu0 0.0
    %329 = vmatpush1.msra.mxu0 0.0
    %330 = vmatprep.subr.mxu0 0.0
    %331 = vmatpush1.msra.mxu0 0.0
    %332 = vmatprep.subr.mxu0 0.0
    %333 = vmatpush1.msra.mxu0 0.0
    %334 = vmatprep.subr.mxu0 0.0
    %335 = vmatpush1.msra.mxu0 0.0
    %336 = vmatprep.subr.mxu0 0.0
    %337 = vmatpush1.msra.mxu0 0.0
    %338 = vmatprep.subr.mxu0 0.0
    %339 = vmatpush1.msra.mxu0 0.0
    %340 = vmatprep.mubr.f32.mxu0 0.0
    %341 = vmatmul.mubr.f32.gmra.mrb[0].mxu0 %v274
    %v342 = vpop.f32.mrb[0].mxu0
    %v343 = vadd.f32 %v270, %v342
    %v344 = vpop.f32.mrb[0].mxu0
    %345 = vdwg.mxu0
    %v346 = vmax.f32 %v343, 0.0
    %v347 = vld [vmem:[#allocation13] sm:$0xff]
    %v348 = vld [vmem:[#allocation13 + $0x8] sm:$0xff]
    %v349 = vld [vmem:[#allocation13 + $0x10] sm:$0xff]
    %v350 = vld [vmem:[#allocation13 + $0x18] sm:$0xff]
    %v351 = vld [vmem:[#allocation13 + $0x20] sm:$0xff]
    %v352 = vld [vmem:[#allocation13 + $0x28] sm:$0xff]
    %v353 = vld [vmem:[#allocation13 + $0x30] sm:$0xff]
    %v354 = vld [vmem:[#allocation13 + $0x38] sm:$0xff]
    %v355 = vld [vmem:[#allocation13 + $0x40] sm:$0xff]
    %v356 = vld [vmem:[#allocation13 + $0x48] sm:$0xff]
    %v357 = vld [vmem:[#allocation13 + $0x50] sm:$0xff]
    %v358 = vld [vmem:[#allocation13 + $0x58] sm:$0xff]
    %v359 = vld [vmem:[#allocation13 + $0x60] sm:$0xff]
    %v360 = vld [vmem:[#allocation13 + $0x68] sm:$0xff]
    %v361 = vld [vmem:[#allocation13 + $0x70] sm:$0xff]
    %v362 = vld [vmem:[#allocation13 + $0x78] sm:$0xff]
    %v363 = vld [vmem:[#allocation13 + $0x80] sm:$0xff]
    %v364 = vld [vmem:[#allocation13 + $0x88] sm:$0xff]
    %v365 = vld [vmem:[#allocation13 + $0x90] sm:$0xff]
    %v366 = vld [vmem:[#allocation13 + $0x98] sm:$0xff]
    %v367 = vld [vmem:[#allocation13 + $0xa0] sm:$0xff]
    %v368 = vld [vmem:[#allocation13 + $0xa8] sm:$0xff]
    %v369 = vld [vmem:[#allocation13 + $0xb0] sm:$0xff]
    %v370 = vld [vmem:[#allocation13 + $0xb8] sm:$0xff]
    %v371 = vld [vmem:[#allocation13 + $0xc0] sm:$0xff]
    %v372 = vld [vmem:[#allocation13 + $0xc8] sm:$0xff]
    %v373 = vld [vmem:[#allocation13 + $0xd0] sm:$0xff]
    %v374 = vld [vmem:[#allocation13 + $0xd8] sm:$0xff]
    %v375 = vld [vmem:[#allocation13 + $0xe0] sm:$0xff]
    %v376 = vld [vmem:[#allocation13 + $0xe8] sm:$0xff]
    %v377 = vld [vmem:[#allocation13 + $0xf0] sm:$0xff]
    %v378 = vld [vmem:[#allocation13 + $0xf8] sm:$0xff]
    %v379 = vld [vmem:[#allocation14] sm:$0xff]
    %v380 = vld [vmem:[#allocation14 + $0x8] sm:$0xff]
    %v381 = vld [vmem:[#allocation14 + $0x10] sm:$0xff]
    %v382 = vld [vmem:[#allocation14 + $0x18] sm:$0xff]
    %v383 = vld [vmem:[#allocation14 + $0x20] sm:$0xff]
    %v384 = vld [vmem:[#allocation14 + $0x28] sm:$0xff]
    %v385 = vld [vmem:[#allocation14 + $0x30] sm:$0xff]
    %v386 = vld [vmem:[#allocation14 + $0x38] sm:$0xff]
    %v387 = vld [vmem:[#allocation14 + $0x40] sm:$0xff]
    %v388 = vld [vmem:[#allocation14 + $0x48] sm:$0xff]
    %v389 = vld [vmem:[#allocation14 + $0x50] sm:$0xff]
    %v390 = vld [vmem:[#allocation14 + $0x58] sm:$0xff]
    %v391 = vld [vmem:[#allocation14 + $0x60] sm:$0xff]
    %v392 = vld [vmem:[#allocation14 + $0x68] sm:$0xff]
    %v393 = vld [vmem:[#allocation14 + $0x70] sm:$0xff]
    %v394 = vld [vmem:[#allocation14 + $0x78] sm:$0xff]
    %v395 = vld [vmem:[#allocation14 + $0x80] sm:$0xff]
    %v396 = vld [vmem:[#allocation14 + $0x88] sm:$0xff]
    %v397 = vld [vmem:[#allocation14 + $0x90] sm:$0xff]
    %v398 = vld [vmem:[#allocation14 + $0x98] sm:$0xff]
    %v399 = vld [vmem:[#allocation14 + $0xa0] sm:$0xff]
    %v400 = vld [vmem:[#allocation14 + $0xa8] sm:$0xff]
    %v401 = vld [vmem:[#allocation14 + $0xb0] sm:$0xff]
    %v402 = vld [vmem:[#allocation14 + $0xb8] sm:$0xff]
    %v403 = vld [vmem:[#allocation14 + $0xc0] sm:$0xff]
    %v404 = vld [vmem:[#allocation14 + $0xc8] sm:$0xff]
    %v405 = vld [vmem:[#allocation14 + $0xd0] sm:$0xff]
    %v406 = vld [vmem:[#allocation14 + $0xd8] sm:$0xff]
    %v407 = vld [vmem:[#allocation14 + $0xe0] sm:$0xff]
    %v408 = vld [vmem:[#allocation14 + $0xe8] sm:$0xff]
    %v409 = vld [vmem:[#allocation14 + $0xf0] sm:$0xff]
    %v410 = vld [vmem:[#allocation14 + $0xf8] sm:$0xff]
    %411 = vmatprep.subr.mxu0 %v380
    %412 = vmatpush1.msra.mxu0 %v379
    %413 = vmatprep.subr.mxu0 %v382
    %414 = vmatpush1.msra.mxu0 %v381
    %415 = vmatprep.subr.mxu0 %v384
    %416 = vmatpush1.msra.mxu0 %v383
    %417 = vmatprep.subr.mxu0 %v386
    %418 = vmatpush1.msra.mxu0 %v385
    %419 = vmatprep.subr.mxu0 %v388
    %420 = vmatpush1.msra.mxu0 %v387
    %421 = vmatprep.subr.mxu0 %v390
    %422 = vmatpush1.msra.mxu0 %v389
    %423 = vmatprep.subr.mxu0 %v392
    %424 = vmatpush1.msra.mxu0 %v391
    %425 = vmatprep.subr.mxu0 %v394
    %426 = vmatpush1.msra.mxu0 %v393
    %427 = vmatprep.subr.mxu0 %v396
    %428 = vmatpush1.msra.mxu0 %v395
    %429 = vmatprep.subr.mxu0 %v398
    %430 = vmatpush1.msra.mxu0 %v397
    %431 = vmatprep.subr.mxu0 %v400
    %432 = vmatpush1.msra.mxu0 %v399
    %433 = vmatprep.subr.mxu0 %v402
    %434 = vmatpush1.msra.mxu0 %v401
    %435 = vmatprep.subr.mxu0 %v404
    %436 = vmatpush1.msra.mxu0 %v403
    %437 = vmatprep.subr.mxu0 %v406
    %438 = vmatpush1.msra.mxu0 %v405
    %439 = vmatprep.subr.mxu0 %v408
    %440 = vmatpush1.msra.mxu0 %v407
    %441 = vmatprep.subr.mxu0 %v410
    %442 = vmatpush1.msra.mxu0 %v409
    %443 = vmatprep.subr.mxu0 0.0
    %444 = vmatpush1.msra.mxu0 0.0
    %445 = vmatprep.subr.mxu0 0.0
    %446 = vmatpush1.msra.mxu0 0.0
    %447 = vmatprep.subr.mxu0 0.0
    %448 = vmatpush1.msra.mxu0 0.0
    %449 = vmatprep.subr.mxu0 0.0
    %450 = vmatpush1.msra.mxu0 0.0
    %451 = vmatprep.subr.mxu0 0.0
    %452 = vmatpush1.msra.mxu0 0.0
    %453 = vmatprep.subr.mxu0 0.0
    %454 = vmatpush1.msra.mxu0 0.0
    %455 = vmatprep.subr.mxu0 0.0
    %456 = vmatpush1.msra.mxu0 0.0
    %457 = vmatprep.subr.mxu0 0.0
    %458 = vmatpush1.msra.mxu0 0.0
    %459 = vmatprep.subr.mxu0 0.0
    %460 = vmatpush1.msra.mxu0 0.0
    %461 = vmatprep.subr.mxu0 0.0
    %462 = vmatpush1.msra.mxu0 0.0
    %463 = vmatprep.subr.mxu0 0.0
    %464 = vmatpush1.msra.mxu0 0.0
    %465 = vmatprep.subr.mxu0 0.0
    %466 = vmatpush1.msra.mxu0 0.0
    %467 = vmatprep.subr.mxu0 0.0
    %468 = vmatpush1.msra.mxu0 0.0
    %469 = vmatprep.subr.mxu0 0.0
    %470 = vmatpush1.msra.mxu0 0.0
    %471 = vmatprep.subr.mxu0 0.0
    %472 = vmatpush1.msra.mxu0 0.0
    %473 = vmatprep.subr.mxu0 0.0
    %474 = vmatpush1.msra.mxu0 0.0
    %475 = vmatprep.mubr.f32.mxu0 0.0
    %476 = vmatmul.mubr.f32.gmra.mrb[0].mxu0 %v346
    %v477 = vpop.f32.mrb[0].mxu0
    %v478 = vadd.f32 0.0, %v477
    %v479 = vpop.f32.mrb[0].mxu0
    %v480 = vadd.f32 0.0, %v479
    %481 = vdwg.mxu0
    %482 = vmatprep.subr.mxu0 %v348
    %483 = vmatpush1.msra.mxu0 %v347
    %484 = vmatprep.subr.mxu0 %v350
    %485 = vmatpush1.msra.mxu0 %v349
    %486 = vmatprep.subr.mxu0 %v352
    %487 = vmatpush1.msra.mxu0 %v351
    %488 = vmatprep.subr.mxu0 %v354
    %489 = vmatpush1.msra.mxu0 %v353
    %490 = vmatprep.subr.mxu0 %v356
    %491 = vmatpush1.msra.mxu0 %v355
    %492 = vmatprep.subr.mxu0 %v358
    %493 = vmatpush1.msra.mxu0 %v357
    %494 = vmatprep.subr.mxu0 %v360
    %495 = vmatpush1.msra.mxu0 %v359
    %496 = vmatprep.subr.mxu0 %v362
    %497 = vmatpush1.msra.mxu0 %v361
    %498 = vmatprep.subr.mxu0 %v364
    %499 = vmatpush1.msra.mxu0 %v363
    %500 = vmatprep.subr.mxu0 %v366
    %501 = vmatpush1.msra.mxu0 %v365
    %502 = vmatprep.subr.mxu0 %v368
    %503 = vmatpush1.msra.mxu0 %v367
    %504 = vmatprep.subr.mxu0 %v370
    %505 = vmatpush1.msra.mxu0 %v369
    %506 = vmatprep.subr.mxu0 %v372
    %507 = vmatpush1.msra.mxu0 %v371
    %508 = vmatprep.subr.mxu0 %v374
    %509 = vmatpush1.msra.mxu0 %v373
    %510 = vmatprep.subr.mxu0 %v376
    %511 = vmatpush1.msra.mxu0 %v375
    %512 = vmatprep.subr.mxu0 %v378
    %513 = vmatpush1.msra.mxu0 %v377
    %514 = vmatprep.subr.mxu0 0.0
    %515 = vmatpush1.msra.mxu0 0.0
    %516 = vmatprep.subr.mxu0 0.0
    %517 = vmatpush1.msra.mxu0 0.0
    %518 = vmatprep.subr.mxu0 0.0
    %519 = vmatpush1.msra.mxu0 0.0
    %520 = vmatprep.subr.mxu0 0.0
    %521 = vmatpush1.msra.mxu0 0.0
    %522 = vmatprep.subr.mxu0 0.0
    %523 = vmatpush1.msra.mxu0 0.0
    %524 = vmatprep.subr.mxu0 0.0
    %525 = vmatpush1.msra.mxu0 0.0
    %526 = vmatprep.subr.mxu0 0.0
    %527 = vmatpush1.msra.mxu0 0.0
    %528 = vmatprep.subr.mxu0 0.0
    %529 = vmatpush1.msra.mxu0 0.0
    %530 = vmatprep.subr.mxu0 0.0
    %531 = vmatpush1.msra.mxu0 0.0
    %532 = vmatprep.subr.mxu0 0.0
    %533 = vmatpush1.msra.mxu0 0.0
    %534 = vmatprep.subr.mxu0 0.0
    %535 = vmatpush1.msra.mxu0 0.0
    %536 = vmatprep.subr.mxu0 0.0
    %537 = vmatpush1.msra.mxu0 0.0
    %538 = vmatprep.subr.mxu0 0.0
    %539 = vmatpush1.msra.mxu0 0.0
    %540 = vmatprep.subr.mxu0 0.0
    %541 = vmatpush1.msra.mxu0 0.0
    %542 = vmatprep.subr.mxu0 0.0
    %543 = vmatpush1.msra.mxu0 0.0
    %544 = vmatprep.subr.mxu0 0.0
    %545 = vmatpush1.msra.mxu0 0.0
    %546 = vmatprep.mubr.f32.mxu0 0.0
    %547 = vmatmul.mubr.f32.gmra.mrb[0].mxu0 %v260
    %v548 = vpop.f32.mrb[0].mxu0
    %v549 = vadd.f32 %v478, %v548
    %v550 = vpop.f32.mrb[0].mxu0
    %v551 = vadd.f32 %v480, %v550
    %552 = vdwg.mxu0
    %v553 = vld [vmem:[#allocation16] sm:$0x3]
    %v555 = vlaneseq
    %v556 = vshrl.u32 %v555, 7
    %v557 = vsub.s32 0, %v556
    %v558 = vrot.slane %v553, %v557
    %v559 = vlaneseq
    %v560 = vshrl.u32 %v559, 7
    %v561 = vsub.s32 1, %v560
    %v562 = vrot.slane %v553, %v561
    %v565 = vadd.f32 %v549, %v558
    %v566 = vadd.f32 %v551, %v562
    %v567 = vmax.f32 %v565, 0.0
    %v568 = vmax.f32 %v566, 0.0
    %v569 = vld [vmem:[#allocation17] sm:$0xff]
    %v570 = vld [vmem:[#allocation17 + $0x8] sm:$0xff]
    %v571 = vld [vmem:[#allocation17 + $0x10] sm:$0xff]
    %v572 = vld [vmem:[#allocation17 + $0x18] sm:$0xff]
    %v573 = vld [vmem:[#allocation17 + $0x20] sm:$0xff]
    %v574 = vld [vmem:[#allocation17 + $0x28] sm:$0xff]
    %v575 = vld [vmem:[#allocation17 + $0x30] sm:$0xff]
    %v576 = vld [vmem:[#allocation17 + $0x38] sm:$0xff]
    %v577 = vld [vmem:[#allocation17 + $0x40] sm:$0xff]
    %v578 = vld [vmem:[#allocation17 + $0x48] sm:$0xff]
    %v579 = vld [vmem:[#allocation17 + $0x50] sm:$0xff]
    %v580 = vld [vmem:[#allocation17 + $0x58] sm:$0xff]
    %v581 = vld [vmem:[#allocation17 + $0x60] sm:$0xff]
    %v582 = vld [vmem:[#allocation17 + $0x68] sm:$0xff]
    %v583 = vld [vmem:[#allocation17 + $0x70] sm:$0xff]
    %v584 = vld [vmem:[#allocation17 + $0x78] sm:$0xff]
    %v585 = vld [vmem:[#allocation17 + $0x80] sm:$0xff]
    %v586 = vld [vmem:[#allocation17 + $0x88] sm:$0xff]
    %v587 = vld [vmem:[#allocation17 + $0x90] sm:$0xff]
    %v588 = vld [vmem:[#allocation17 + $0x98] sm:$0xff]
    %v589 = vld [vmem:[#allocation17 + $0xa0] sm:$0xff]
    %v590 = vld [vmem:[#allocation17 + $0xa8] sm:$0xff]
    %v591 = vld [vmem:[#allocation17 + $0xb0] sm:$0xff]
    %v592 = vld [vmem:[#allocation17 + $0xb8] sm:$0xff]
    %v593 = vld [vmem:[#allocation17 + $0xc0] sm:$0xff]
    %v594 = vld [vmem:[#allocation17 + $0xc8] sm:$0xff]
    %v595 = vld [vmem:[#allocation17 + $0xd0] sm:$0xff]
    %v596 = vld [vmem:[#allocation17 + $0xd8] sm:$0xff]
    %v597 = vld [vmem:[#allocation17 + $0xe0] sm:$0xff]
    %v598 = vld [vmem:[#allocation17 + $0xe8] sm:$0xff]
    %v599 = vld [vmem:[#allocation17 + $0xf0] sm:$0xff]
    %v600 = vld [vmem:[#allocation17 + $0xf8] sm:$0xff]
    %v601 = vld [vmem:[#allocation19] sm:$0x1]
    %v603 = vlaneseq
    %v604 = vshrl.u32 %v603, 7
    %v605 = vsub.s32 0, %v604
    %v606 = vrot.slane %v601, %v605
    %608 = vmatprep.subr.mxu0 0.0
    %609 = vmatpush1.msra.mxu0 %v569
    %610 = vmatprep.subr.mxu0 0.0
    %611 = vmatpush1.msra.mxu0 %v570
    %612 = vmatprep.subr.mxu0 0.0
    %613 = vmatpush1.msra.mxu0 %v571
    %614 = vmatprep.subr.mxu0 0.0
    %615 = vmatpush1.msra.mxu0 %v572
    %616 = vmatprep.subr.mxu0 0.0
    %617 = vmatpush1.msra.mxu0 %v573
    %618 = vmatprep.subr.mxu0 0.0
    %619 = vmatpush1.msra.mxu0 %v574
    %620 = vmatprep.subr.mxu0 0.0
    %621 = vmatpush1.msra.mxu0 %v575
    %622 = vmatprep.subr.mxu0 0.0
    %623 = vmatpush1.msra.mxu0 %v576
    %624 = vmatprep.subr.mxu0 0.0
    %625 = vmatpush1.msra.mxu0 %v577
    %626 = vmatprep.subr.mxu0 0.0
    %627 = vmatpush1.msra.mxu0 %v578
    %628 = vmatprep.subr.mxu0 0.0
    %629 = vmatpush1.msra.mxu0 %v579
    %630 = vmatprep.subr.mxu0 0.0
    %631 = vmatpush1.msra.mxu0 %v580
    %632 = vmatprep.subr.mxu0 0.0
    %633 = vmatpush1.msra.mxu0 %v581
    %634 = vmatprep.subr.mxu0 0.0
    %635 = vmatpush1.msra.mxu0 %v582
    %636 = vmatprep.subr.mxu0 0.0
    %637 = vmatpush1.msra.mxu0 %v583
    %638 = vmatprep.subr.mxu0 0.0
    %639 = vmatpush1.msra.mxu0 %v584
    %640 = vmatprep.subr.mxu0 0.0
    %641 = vmatpush1.msra.mxu0 %v585
    %642 = vmatprep.subr.mxu0 0.0
    %643 = vmatpush1.msra.mxu0 %v586
    %644 = vmatprep.subr.mxu0 0.0
    %645 = vmatpush1.msra.mxu0 %v587
    %646 = vmatprep.subr.mxu0 0.0
    %647 = vmatpush1.msra.mxu0 %v588
    %648 = vmatprep.subr.mxu0 0.0
    %649 = vmatpush1.msra.mxu0 %v589
    %650 = vmatprep.subr.mxu0 0.0
    %651 = vmatpush1.msra.mxu0 %v590
    %652 = vmatprep.subr.mxu0 0.0
    %653 = vmatpush1.msra.mxu0 %v591
    %654 = vmatprep.subr.mxu0 0.0
    %655 = vmatpush1.msra.mxu0 %v592
    %656 = vmatprep.subr.mxu0 0.0
    %657 = vmatpush1.msra.mxu0 %v593
    %658 = vmatprep.subr.mxu0 0.0
    %659 = vmatpush1.msra.mxu0 %v594
    %660 = vmatprep.subr.mxu0 0.0
    %661 = vmatpush1.msra.mxu0 %v595
    %662 = vmatprep.subr.mxu0 0.0
    %663 = vmatpush1.msra.mxu0 %v596
    %664 = vmatprep.subr.mxu0 0.0
    %665 = vmatpush1.msra.mxu0 %v597
    %666 = vmatprep.subr.mxu0 0.0
    %667 = vmatpush1.msra.mxu0 %v598
    %668 = vmatprep.subr.mxu0 0.0
    %669 = vmatpush1.msra.mxu0 %v599
    %670 = vmatprep.subr.mxu0 0.0
    %671 = vmatpush1.msra.mxu0 %v600
    %672 = vmatprep.mubr.f32.mxu0 %v568
    %673 = vmatmul.mubr.f32.gmra.mrb[0].mxu0 %v567
    %v674 = vpop.f32.mrb[0].mxu0
    %v675 = vadd.f32 %v606, %v674
    %v676 = vpop.f32.mrb[0].mxu0
    %677 = vdwg.mxu0
    %678 = vst [vmem:[#allocation20] sm:$0xff] %v675
    // Predicated region
    $region90: #{tpu_custom_call.1} parent=1 // pred_check
      _
    $region91: #{tpu_custom_call.1} parent=1 // pred_check_branch
      %680 = sbr.rel (0) target = $region93
    $region92: #{tpu_custom_call.1} parent=1 // pred_region
      %s682 = ssub.s32 128, 128
      %683 = vsyncadd [#allocation4], %s682
      %s685 = sshll.u32 [#allocation20], 4
      %s686 = int_to_ptr.vmem [resolvable:$true] %s685
      %688 = dma.vmem_to_hbm [thread:$0]  %s686, 128, %s11, [#allocation4]
    $region93: #{tpu_custom_call.1} parent=1 // pred_fallthru
      _
    // Predicated region
    $region94: #{tpu_custom_call.1} parent=1 // pred_check
      _
    $region95: #{tpu_custom_call.1} parent=1 // pred_check_branch
      %690 = sbr.rel (0) target = $region97
    $region96: #{tpu_custom_call.1} parent=1 // pred_region
      %691 = dma.done [#allocation4], 128
    $region97: #{tpu_custom_call.1} parent=1 // pred_fallthru
      _
    %692 = vsyncpa [#allocation3], 1
    %693 = vsyncpa [#allocation6], 1
    %694 = vsyncpa [#allocation9], 1
    %695 = vsyncpa [#allocation12], 1
    %696 = vsyncpa [#allocation15], 1
    %697 = vsyncpa [#allocation18], 1
    %698 = vsyncpa [#allocation4], 1

</llo_original>
